<compile_context>
chip_gen: v6e
topology: v6e:2x2x1
jax: 0.10.0
libtpu: 0.0.40
codegen_flags: <defaults>
</compile_context>

<pallas_src>
import functools

import jax
import jax.numpy as jnp
from jax.experimental import pallas as pl
from jax.experimental.pallas import tpu as pltpu

BN_EPS = 1e-5


def _round_up(x, m):
    return ((x + m - 1) // m) * m


def _conv_stats_kernel(apply_act, mask_cols, n_valid, tile_n, *refs):
    """One MLP layer step on a (C_in, TILE_N) slab.

    apply_act=False (first layer):  refs = (x, w, h_out, stat_out)
    apply_act=True  (later layers): refs = (x, w, scale, shift, h_out, stat_out)

    x:     (C_in, TILE_N)      previous layer's pre-BN conv output (or feat)
    w:     (C_out, C_in) bf16  1x1-conv weight (PyTorch (out, in) layout)
    scale: (C_in, 1) f32       folded BN scale of the previous layer
    shift: (C_in, 1) f32       folded BN shift of the previous layer
    h_out: (C_out, TILE_N)     this layer's pre-BN conv output (act_dtype)
    stat:  (C_out, 2) f32      per-tile [sum(h), sum(h*h)] over *valid* columns
    """
    if apply_act:
        x_ref, w_ref, scale_ref, shift_ref, h_ref, stat_ref = refs
        x = x_ref[...].astype(jnp.float32)
        # Previous layer's BatchNorm folded into a single FMA, then ReLU.
        x = jnp.maximum(x * scale_ref[...] + shift_ref[...], 0.0)
        xb = x.astype(jnp.bfloat16)
    else:
        x_ref, w_ref, h_ref, stat_ref = refs
        xb = x_ref[...].astype(jnp.bfloat16)

    # 1x1 conv (bias=False) == (C_out, C_in) @ (C_in, TILE_N): bf16 MXU, f32 acc.
    h = jnp.dot(w_ref[...], xb, preferred_element_type=jnp.float32)
    h_ref[...] = h.astype(h_ref.dtype)

    # Per-tile partial BN statistics (reduced across tiles in the wrapper).
    if mask_cols:
        t = pl.program_id(1)
        col = jax.lax.broadcasted_iota(jnp.int32, (1, tile_n), 1)
        valid = (t * tile_n + col) < n_valid
        hm = h * valid.astype(jnp.float32)
    else:
        hm = h
    stat_ref[:, 0:1] = jnp.sum(hm, axis=1, keepdims=True)      # sum(h)
    stat_ref[:, 1:2] = jnp.sum(hm * h, axis=1, keepdims=True)   # sum(h^2)


def _final_conv_kernel(x_ref, w_ref, scale_ref, shift_ref, out_ref):
    """Last layer's folded BN + ReLU, then the final 1x1 conv to 3 channels."""
    x = x_ref[...].astype(jnp.float32)
    x = jnp.maximum(x * scale_ref[...] + shift_ref[...], 0.0)
    out_ref[...] = jnp.dot(
        w_ref[...], x.astype(jnp.bfloat16), preferred_element_type=jnp.float32
    ).astype(out_ref.dtype)


@functools.partial(jax.jit, static_argnames=("tile_n", "act_dtype"))
def flow_predictor_pallas(feat, weights, gammas, betas, w_out, *,
                          tile_n=2048, act_dtype=jnp.bfloat16):
    """feat: (B, C_in, N) -> (B, 3, N) f32.

    weights[i]: (C_out_i, C_in_i)   (PyTorch Conv2d weight squeezed to 2-D)
    gammas[i], betas[i]: (C_out_i,) BatchNorm2d affine parameters
    w_out: (3, C_last)
    act_dtype: dtype of HBM intermediate activations (bf16 default halves HBM
               traffic; statistics / scale / shift / output stay f32).
    """
    B, c_in0, N = feat.shape
    M = B * N  # BatchNorm reduces over all (B, N, 1) positions

    # --- tile / grid selection --------------------------------------------
    tile_n = max(128, _round_up(int(tile_n), 128))
    tile_n = min(tile_n, _round_up(N, 128))
    if B == 1 and N > 128:
        # Keep >=2 grid blocks so v7x megacore can shard across both TCs.
        tile_n = min(tile_n, max(128, _round_up((N + 1) // 2, 128)))
    n_pad = _round_up(N, tile_n)
    nt = n_pad // tile_n
    mask_cols = (n_pad != N)
    grid = (B, nt)

    # --- explicit VMEM budget (double-buffered blocks) ----------------------
    act_bytes = jnp.dtype(act_dtype).itemsize
    in_bytes = jnp.dtype(feat.dtype).itemsize

    def _layer_vmem(cin, cout, xb, hb):
        return (2 * cin * tile_n * xb        # x tile, double buffered
                + 2 * cout * tile_n * hb     # h tile, double buffered
                + 2 * cout * cin * 2         # bf16 weight
                + 2 * cout * 2 * 4           # merged stat block
                + 4 * cin * 4)               # scale / shift

    vmem_need, cin, xb = 0, c_in0, in_bytes
    for w in weights:
        cout = w.shape[0]
        vmem_need = max(vmem_need, _layer_vmem(cin, cout, xb, act_bytes))
        cin, xb = cout, act_bytes
    vmem_need = max(vmem_need, _layer_vmem(cin, 3, xb, 4))
    vmem_limit = int(min(96 << 20, max(32 << 20, 2 * vmem_need + (4 << 20))))

    compiler_params = pltpu.CompilerParams(
        dimension_semantics=("parallel", "parallel"),
        vmem_limit_bytes=vmem_limit)

    def act_spec(c):
        return pl.BlockSpec((None, c, tile_n), lambda b, t: (b, 0, t))

    def vec_spec(c):
        return pl.BlockSpec((c, 1), lambda b, t: (0, 0))

    def stat_spec(c):
        return pl.BlockSpec((None, None, c, 2), lambda b, t: (b, t, 0, 0))

    def wgt_spec(co, ci):
        return pl.BlockSpec((co, ci), lambda b, t: (0, 0))

    h = feat
    if mask_cols:
        h = jnp.pad(h, ((0, 0), (0, 0), (0, n_pad - N)))

    scale = shift = None
    for li, (w, g, beta) in enumerate(zip(weights, gammas, betas)):
        c_out, c_in = w.shape
        apply_act = li > 0

        inputs = [h, w.astype(jnp.bfloat16)]
        in_specs = [act_spec(c_in), wgt_spec(c_out, c_in)]
        if apply_act:
            inputs += [scale, shift]
            in_specs += [vec_spec(c_in), vec_spec(c_in)]

        h_next, pstat = pl.pallas_call(
            functools.partial(_conv_stats_kernel, apply_act, mask_cols, N, tile_n),
            grid=grid,
            in_specs=in_specs,
            out_specs=[act_spec(c_out), stat_spec(c_out)],
            out_shape=[
                jax.ShapeDtypeStruct((B, c_out, n_pad), act_dtype),
                jax.ShapeDtypeStruct((B, nt, c_out, 2), jnp.float32),
            ],
            compiler_params=compiler_params,
        )(*inputs)

        # Exact global training-mode BatchNorm stats (biased variance): reduce
        # the tiny per-tile partials and fold BN into one FMA.  These few small
        # ops fuse under the surrounding jit.
        # TODO(synk): fold this reduction into the next pallas_call (pass pstat
        # as a whole-array VMEM input) to remove the remaining launch gap.
        stats = jnp.sum(pstat, axis=(0, 1))            # (c_out, 2)
        mean = stats[:, 0] / M                          # E[h]
        mean_sq = stats[:, 1] / M                       # E[h^2]
        var = jnp.maximum(mean_sq - mean * mean, 0.0)   # biased variance
        scl = g * jax.lax.rsqrt(var + BN_EPS)
        scale = scl.reshape(c_out, 1).astype(jnp.float32)
        shift = (beta - mean * scl).reshape(c_out, 1).astype(jnp.float32)
        h = h_next

    c_last = w_out.shape[1]
    out = pl.pallas_call(
        _final_conv_kernel,
        grid=grid,
        in_specs=[act_spec(c_last), wgt_spec(3, c_last),
                  vec_spec(c_last), vec_spec(c_last)],
        out_specs=pl.BlockSpec((None, 3, tile_n), lambda b, t: (b, 0, t)),
        out_shape=jax.ShapeDtypeStruct((B, 3, n_pad), jnp.float32),
        compiler_params=compiler_params,
    )(h, w_out.astype(jnp.bfloat16), scale, shift)

    if mask_cols:
        out = out[:, :, :N]
    return out


def flow_predictor_ref(feat, weights, gammas, betas, w_out):
    """Pure-JAX f32 reference with the PyTorch module's (training-mode) semantics."""
    h = feat.astype(jnp.float32)  # (B, C, N)
    for w, g, b in zip(weights, gammas, betas):
        h = jnp.einsum("oi,bin->bon", w, h)
        mean = jnp.mean(h, axis=(0, 2), keepdims=True)
        var = jnp.mean((h - mean) ** 2, axis=(0, 2), keepdims=True)
        h = (h - mean) * jax.lax.rsqrt(var + BN_EPS) * g.reshape(1, -1, 1) \
            + b.reshape(1, -1, 1)
        h = jnp.maximum(h, 0.0)
    return jnp.einsum("oi,bin->bon", w_out, h)


def init_params(key, in_channel, mlp):
    """Deterministic synthetic parameters matching FlowPredictor.__init__ shapes."""
    weights, gammas, betas = [], [], []
    last = in_channel
    for out_ch in mlp:
        key, kw, kg, kb = jax.random.split(key, 4)
        # Conv2d(last, out_ch, 1, bias=False).weight is (out_ch, last, 1, 1);
        # we keep the squeezed (out_ch, last) layout directly.
        weights.append(jax.random.normal(kw, (out_ch, last), jnp.float32) * 0.1)
        gammas.append(1.0 + 0.1 * jax.random.normal(kg, (out_ch,), jnp.float32))
        betas.append(0.1 * jax.random.normal(kb, (out_ch,), jnp.float32))
        last = out_ch
    key, kw = jax.random.split(key)
    w_out = jax.random.normal(kw, (3, last), jnp.float32) * 0.1  # conv2 weight
    return weights, gammas, betas, w_out


if __name__ == "__main__":
    # Small shapes; N=200 with TILE_N=128 exercises padding + masked BN stats,
    # grid = (B, nt) = (2, 2) exercises the multi-tile cross-tile reduction.
    B, C_IN, N = 2, 4, 200
    MLP = (32, 32)
    TILE_N = 128

    key = jax.random.PRNGKey(0)
    key, kf = jax.random.split(key)
    feat = jax.random.normal(kf, (B, C_IN, N), jnp.float32)
    weights, gammas, betas, w_out = init_params(key, C_IN, MLP)

    out = flow_predictor_pallas(feat, weights, gammas, betas, w_out,
                                tile_n=TILE_N)   # bf16 activations by default
    out = jax.block_until_ready(out)

    ref = flow_predictor_ref(feat, weights, gammas, betas, w_out)
    assert out.shape == (B, 3, N), out.shape
    max_err = float(jnp.max(jnp.abs(out - ref)))
    ref_scale = float(jnp.max(jnp.abs(ref))) + 1e-6
    # bf16 activations + bf16 MXU operands vs. the all-f32 reference: allow a
    # few parts-per-hundred relative error; BN/masking bugs would be >>4e-2.
    assert max_err / ref_scale < 4e-2, (max_err, ref_scale)

    print("KERNEL_OK")
</pallas_src>

<mosaic_0001>
module attributes {stable_mosaic.version = 11 : i64} {
  func.func @_conv_stats_kernel(%arg0: i32, %arg1: i32, %arg2: memref<1x4x128xf32, #tpu.memory_space<vmem>>, %arg3: memref<32x4xbf16, #tpu.memory_space<vmem>>, %arg4: memref<1x32x128xbf16, #tpu.memory_space<vmem>>, %arg5: memref<1x1x32x2xf32, #tpu.memory_space<vmem>>) attributes {dimension_semantics = [#tpu.dimension_semantics<parallel>, #tpu.dimension_semantics<parallel>], iteration_bounds = array<i64: 2, 2>, scalar_prefetch = 0 : i64, scratch_operands = 0 : i64, tpu.core_type = #tpu.core_type<tc>, window_params = [{transform_indices = @transform_0, window_bounds = array<i64: 1, 4, 128>}, {pipeline_mode = #tpu.pipeline_mode<synchronous>, transform_indices = @transform_1, window_bounds = array<i64: 32, 4>}, {transform_indices = @transform_2, window_bounds = array<i64: 1, 32, 128>}, {transform_indices = @transform_3, window_bounds = array<i64: 1, 1, 32, 2>}]} {
    %c0 = arith.constant 0 : index
    %c0_0 = arith.constant 0 : index
    %c0_1 = arith.constant 0 : index
    %0 = vector.load %arg2[%c0, %c0_0, %c0_1] : memref<1x4x128xf32, #tpu.memory_space<vmem>>, vector<1x4x128xf32>
    %1 = vector.shape_cast %0 : vector<1x4x128xf32> to vector<4x128xf32>
    %2 = arith.truncf %1 : vector<4x128xf32> to vector<4x128xbf16>
    %c0_2 = arith.constant 0 : index
    %c0_3 = arith.constant 0 : index
    %3 = vector.load %arg3[%c0_2, %c0_3] : memref<32x4xbf16, #tpu.memory_space<vmem>>, vector<32x4xbf16>
    %cst = arith.constant dense<0.000000e+00> : vector<32x128xf32>
    %4 = tpu.matmul %3, %2, %cst {dimension_numbers = #tpu.dot_dimension_numbers<[1], [0], [0], [1], [0, 0, 1, 1], [], []>} : vector<32x4xbf16>, vector<4x128xbf16>, vector<32x128xf32> -> vector<32x128xf32>
    %5 = arith.truncf %4 : vector<32x128xf32> to vector<32x128xbf16>
    %c0_4 = arith.constant 0 : index
    %c0_5 = arith.constant 0 : index
    %c0_6 = arith.constant 0 : index
    %6 = vector.load %arg4[%c0_4, %c0_5, %c0_6] : memref<1x32x128xbf16, #tpu.memory_space<vmem>>, vector<1x32x128xbf16>
    %7 = vector.shape_cast %6 : vector<1x32x128xbf16> to vector<32x128xbf16>
    %8 = vector.shape_cast %5 : vector<32x128xbf16> to vector<1x32x128xbf16>
    tpu.vector_store %arg4[%c0_4, %c0_5, %c0_6], %8 {strides = array<i32>} : memref<1x32x128xbf16, #tpu.memory_space<vmem>>, vector<1x32x128xbf16>,
    %9 = tpu.iota {dimensions = array<i32: 1>} : vector<1x128xi32>
    %c128_i32 = arith.constant 128 : i32
    %10 = arith.muli %arg1, %c128_i32 : i32
    %11 = vector.broadcast %10 : i32 to vector<1x128xi32>
    %12 = arith.addi %11, %9 : vector<1x128xi32>
    %c200_i32 = arith.constant 200 : i32
    %13 = vector.broadcast %c200_i32 : i32 to vector<1x128xi32>
    %14 = arith.cmpi slt, %12, %13 : vector<1x128xi32>
    %15 = arith.extui %14 : vector<1x128xi1> to vector<1x128xi32>
    %16 = arith.sitofp %15 : vector<1x128xi32> to vector<1x128xf32>
    %17 = vector.broadcast %16 : vector<1x128xf32> to vector<32x128xf32>
    %18 = arith.mulf %4, %17 : vector<32x128xf32>
    %cst_7 = arith.constant dense<0.000000e+00> : vector<32xf32>
    %19 = vector.multi_reduction <add>, %18, %cst_7 [1] : vector<32x128xf32> to vector<32xf32>
    %20 = vector.shape_cast %19 : vector<32xf32> to vector<32x1xf32>
    %c0_8 = arith.constant 0 : index
    %c0_9 = arith.constant 0 : index
    %c0_10 = arith.constant 0 : index
    %c0_11 = arith.constant 0 : index
    %21 = vector.load %arg5[%c0_8, %c0_9, %c0_10, %c0_11] : memref<1x1x32x2xf32, #tpu.memory_space<vmem>>, vector<1x1x32x1xf32>
    %22 = vector.shape_cast %21 : vector<1x1x32x1xf32> to vector<32x1xf32>
    %23 = vector.shape_cast %20 : vector<32x1xf32> to vector<1x1x32x1xf32>
    tpu.vector_store %arg5[%c0_8, %c0_9, %c0_10, %c0_11], %23 {strides = array<i32>} : memref<1x1x32x2xf32, #tpu.memory_space<vmem>>, vector<1x1x32x1xf32>,
    %24 = arith.mulf %18, %4 : vector<32x128xf32>
    %cst_12 = arith.constant dense<0.000000e+00> : vector<32xf32>
    %25 = vector.multi_reduction <add>, %24, %cst_12 [1] : vector<32x128xf32> to vector<32xf32>
    %26 = vector.shape_cast %25 : vector<32xf32> to vector<32x1xf32>
    %c0_13 = arith.constant 0 : index
    %c0_14 = arith.constant 0 : index
    %c0_15 = arith.constant 0 : index
    %c1 = arith.constant 1 : index
    %27 = vector.load %arg5[%c0_13, %c0_14, %c0_15, %c1] : memref<1x1x32x2xf32, #tpu.memory_space<vmem>>, vector<1x1x32x1xf32>
    %28 = vector.shape_cast %27 : vector<1x1x32x1xf32> to vector<32x1xf32>
    %29 = vector.shape_cast %26 : vector<32x1xf32> to vector<1x1x32x1xf32>
    tpu.vector_store %arg5[%c0_13, %c0_14, %c0_15, %c1], %29 {strides = array<i32>} : memref<1x1x32x2xf32, #tpu.memory_space<vmem>>, vector<1x1x32x1xf32>,
    return
  }
  func.func @transform_0(%arg0: i32, %arg1: i32) -> (i32, i32, i32) {
    %c0_i32 = arith.constant 0 : i32
    %c0_i32_0 = arith.constant 0 : i32
    return %arg0, %c0_i32, %arg1 : i32, i32, i32
  }
  func.func @transform_1(%arg0: i32, %arg1: i32) -> (i32, i32) {
    %c0_i32 = arith.constant 0 : i32
    %c0_i32_0 = arith.constant 0 : i32
    %c0_i32_1 = arith.constant 0 : i32
    return %c0_i32, %c0_i32_0 : i32, i32
  }
  func.func @transform_2(%arg0: i32, %arg1: i32) -> (i32, i32, i32) {
    %c0_i32 = arith.constant 0 : i32
    %c0_i32_0 = arith.constant 0 : i32
    return %arg0, %c0_i32, %arg1 : i32, i32, i32
  }
  func.func @transform_3(%arg0: i32, %arg1: i32) -> (i32, i32, i32, i32) {
    %c0_i32 = arith.constant 0 : i32
    %c0_i32_0 = arith.constant 0 : i32
    %c0_i32_1 = arith.constant 0 : i32
    return %arg0, %arg1, %c0_i32, %c0_i32_0 : i32, i32, i32, i32
  }
}

module attributes {stable_mosaic.version = 11 : i64} {
  func.func @_conv_stats_kernel(%arg0: i32, %arg1: i32, %arg2: memref<1x32x128xbf16, #tpu.memory_space<vmem>>, %arg3: memref<32x32xbf16, #tpu.memory_space<vmem>>, %arg4: memref<32x1xf32, #tpu.memory_space<vmem>>, %arg5: memref<32x1xf32, #tpu.memory_space<vmem>>, %arg6: memref<1x32x128xbf16, #tpu.memory_space<vmem>>, %arg7: memref<1x1x32x2xf32, #tpu.memory_space<vmem>>) attributes {dimension_semantics = [#tpu.dimension_semantics<parallel>, #tpu.dimension_semantics<parallel>], iteration_bounds = array<i64: 2, 2>, scalar_prefetch = 0 : i64, scratch_operands = 0 : i64, tpu.core_type = #tpu.core_type<tc>, window_params = [{transform_indices = @transform_0, window_bounds = array<i64: 1, 32, 128>}, {pipeline_mode = #tpu.pipeline_mode<synchronous>, transform_indices = @transform_1, window_bounds = array<i64: 32, 32>}, {pipeline_mode = #tpu.pipeline_mode<synchronous>, transform_indices = @transform_2, window_bounds = array<i64: 32, 1>}, {pipeline_mode = #tpu.pipeline_mode<synchronous>, transform_indices = @transform_3, window_bounds = array<i64: 32, 1>}, {transform_indices = @transform_4, window_bounds = array<i64: 1, 32, 128>}, {transform_indices = @transform_5, window_bounds = array<i64: 1, 1, 32, 2>}]} {
    %c0 = arith.constant 0 : index
    %c0_0 = arith.constant 0 : index
    %c0_1 = arith.constant 0 : index
    %0 = vector.load %arg2[%c0, %c0_0, %c0_1] : memref<1x32x128xbf16, #tpu.memory_space<vmem>>, vector<1x32x128xbf16>
    %1 = vector.shape_cast %0 : vector<1x32x128xbf16> to vector<32x128xbf16>
    %2 = arith.extf %1 : vector<32x128xbf16> to vector<32x128xf32>
    %c0_2 = arith.constant 0 : index
    %c0_3 = arith.constant 0 : index
    %3 = vector.load %arg4[%c0_2, %c0_3] : memref<32x1xf32, #tpu.memory_space<vmem>>, vector<32x1xf32>
    %4 = vector.broadcast %3 : vector<32x1xf32> to vector<32x128xf32>
    %5 = arith.mulf %2, %4 : vector<32x128xf32>
    %c0_4 = arith.constant 0 : index
    %c0_5 = arith.constant 0 : index
    %6 = vector.load %arg5[%c0_4, %c0_5] : memref<32x1xf32, #tpu.memory_space<vmem>>, vector<32x1xf32>
    %7 = vector.broadcast %6 : vector<32x1xf32> to vector<32x128xf32>
    %8 = arith.addf %5, %7 : vector<32x128xf32>
    %cst = arith.constant 0.000000e+00 : f32
    %9 = vector.broadcast %cst : f32 to vector<32x128xf32>
    %10 = arith.maximumf %8, %9 : vector<32x128xf32>
    %11 = arith.truncf %10 : vector<32x128xf32> to vector<32x128xbf16>
    %c0_6 = arith.constant 0 : index
    %c0_7 = arith.constant 0 : index
    %12 = vector.load %arg3[%c0_6, %c0_7] : memref<32x32xbf16, #tpu.memory_space<vmem>>, vector<32x32xbf16>
    %cst_8 = arith.constant dense<0.000000e+00> : vector<32x128xf32>
    %13 = tpu.matmul %12, %11, %cst_8 {dimension_numbers = #tpu.dot_dimension_numbers<[1], [0], [0], [1], [0, 0, 1, 1], [], []>} : vector<32x32xbf16>, vector<32x128xbf16>, vector<32x128xf32> -> vector<32x128xf32>
    %14 = arith.truncf %13 : vector<32x128xf32> to vector<32x128xbf16>
    %c0_9 = arith.constant 0 : index
    %c0_10 = arith.constant 0 : index
    %c0_11 = arith.constant 0 : index
    %15 = vector.load %arg6[%c0_9, %c0_10, %c0_11] : memref<1x32x128xbf16, #tpu.memory_space<vmem>>, vector<1x32x128xbf16>
    %16 = vector.shape_cast %15 : vector<1x32x128xbf16> to vector<32x128xbf16>
    %17 = vector.shape_cast %14 : vector<32x128xbf16> to vector<1x32x128xbf16>
    tpu.vector_store %arg6[%c0_9, %c0_10, %c0_11], %17 {strides = array<i32>} : memref<1x32x128xbf16, #tpu.memory_space<vmem>>, vector<1x32x128xbf16>,
    %18 = tpu.iota {dimensions = array<i32: 1>} : vector<1x128xi32>
    %c128_i32 = arith.constant 128 : i32
    %19 = arith.muli %arg1, %c128_i32 : i32
    %20 = vector.broadcast %19 : i32 to vector<1x128xi32>
    %21 = arith.addi %20, %18 : vector<1x128xi32>
    %c200_i32 = arith.constant 200 : i32
    %22 = vector.broadcast %c200_i32 : i32 to vector<1x128xi32>
    %23 = arith.cmpi slt, %21, %22 : vector<1x128xi32>
    %24 = arith.extui %23 : vector<1x128xi1> to vector<1x128xi32>
    %25 = arith.sitofp %24 : vector<1x128xi32> to vector<1x128xf32>
    %26 = vector.broadcast %25 : vector<1x128xf32> to vector<32x128xf32>
    %27 = arith.mulf %13, %26 : vector<32x128xf32>
    %cst_12 = arith.constant dense<0.000000e+00> : vector<32xf32>
    %28 = vector.multi_reduction <add>, %27, %cst_12 [1] : vector<32x128xf32> to vector<32xf32>
    %29 = vector.shape_cast %28 : vector<32xf32> to vector<32x1xf32>
    %c0_13 = arith.constant 0 : index
    %c0_14 = arith.constant 0 : index
    %c0_15 = arith.constant 0 : index
    %c0_16 = arith.constant 0 : index
    %30 = vector.load %arg7[%c0_13, %c0_14, %c0_15, %c0_16] : memref<1x1x32x2xf32, #tpu.memory_space<vmem>>, vector<1x1x32x1xf32>
    %31 = vector.shape_cast %30 : vector<1x1x32x1xf32> to vector<32x1xf32>
    %32 = vector.shape_cast %29 : vector<32x1xf32> to vector<1x1x32x1xf32>
    tpu.vector_store %arg7[%c0_13, %c0_14, %c0_15, %c0_16], %32 {strides = array<i32>} : memref<1x1x32x2xf32, #tpu.memory_space<vmem>>, vector<1x1x32x1xf32>,
    %33 = arith.mulf %27, %13 : vector<32x128xf32>
    %cst_17 = arith.constant dense<0.000000e+00> : vector<32xf32>
    %34 = vector.multi_reduction <add>, %33, %cst_17 [1] : vector<32x128xf32> to vector<32xf32>
    %35 = vector.shape_cast %34 : vector<32xf32> to vector<32x1xf32>
    %c0_18 = arith.constant 0 : index
    %c0_19 = arith.constant 0 : index
    %c0_20 = arith.constant 0 : index
    %c1 = arith.constant 1 : index
    %36 = vector.load %arg7[%c0_18, %c0_19, %c0_20, %c1] : memref<1x1x32x2xf32, #tpu.memory_space<vmem>>, vector<1x1x32x1xf32>
    %37 = vector.shape_cast %36 : vector<1x1x32x1xf32> to vector<32x1xf32>
    %38 = vector.shape_cast %35 : vector<32x1xf32> to vector<1x1x32x1xf32>
    tpu.vector_store %arg7[%c0_18, %c0_19, %c0_20, %c1], %38 {strides = array<i32>} : memref<1x1x32x2xf32, #tpu.memory_space<vmem>>, vector<1x1x32x1xf32>,
    return
  }
  func.func @transform_0(%arg0: i32, %arg1: i32) -> (i32, i32, i32) {
    %c0_i32 = arith.constant 0 : i32
    %c0_i32_0 = arith.constant 0 : i32
    return %arg0, %c0_i32, %arg1 : i32, i32, i32
  }
  func.func @transform_1(%arg0: i32, %arg1: i32) -> (i32, i32) {
    %c0_i32 = arith.constant 0 : i32
    %c0_i32_0 = arith.constant 0 : i32
    %c0_i32_1 = arith.constant 0 : i32
    return %c0_i32, %c0_i32_0 : i32, i32
  }
  func.func @transform_2(%arg0: i32, %arg1: i32) -> (i32, i32) {
    %c0_i32 = arith.constant 0 : i32
    %c0_i32_0 = arith.constant 0 : i32
    %c0_i32_1 = arith.constant 0 : i32
    return %c0_i32, %c0_i32_0 : i32, i32
  }
  func.func @transform_3(%arg0: i32, %arg1: i32) -> (i32, i32) {
    %c0_i32 = arith.constant 0 : i32
    %c0_i32_0 = arith.constant 0 : i32
    %c0_i32_1 = arith.constant 0 : i32
    return %c0_i32, %c0_i32_0 : i32, i32
  }
  func.func @transform_4(%arg0: i32, %arg1: i32) -> (i32, i32, i32) {
    %c0_i32 = arith.constant 0 : i32
    %c0_i32_0 = arith.constant 0 : i32
    return %arg0, %c0_i32, %arg1 : i32, i32, i32
  }
  func.func @transform_5(%arg0: i32, %arg1: i32) -> (i32, i32, i32, i32) {
    %c0_i32 = arith.constant 0 : i32
    %c0_i32_0 = arith.constant 0 : i32
    %c0_i32_1 = arith.constant 0 : i32
    return %arg0, %arg1, %c0_i32, %c0_i32_0 : i32, i32, i32, i32
  }
}

module attributes {stable_mosaic.version = 11 : i64} {
  func.func @_final_conv_kernel(%arg0: i32, %arg1: i32, %arg2: memref<1x32x128xbf16, #tpu.memory_space<vmem>>, %arg3: memref<3x32xbf16, #tpu.memory_space<vmem>>, %arg4: memref<32x1xf32, #tpu.memory_space<vmem>>, %arg5: memref<32x1xf32, #tpu.memory_space<vmem>>, %arg6: memref<1x3x128xf32, #tpu.memory_space<vmem>>) attributes {dimension_semantics = [#tpu.dimension_semantics<parallel>, #tpu.dimension_semantics<parallel>], iteration_bounds = array<i64: 2, 2>, scalar_prefetch = 0 : i64, scratch_operands = 0 : i64, tpu.core_type = #tpu.core_type<tc>, window_params = [{transform_indices = @transform_0, window_bounds = array<i64: 1, 32, 128>}, {pipeline_mode = #tpu.pipeline_mode<synchronous>, transform_indices = @transform_1, window_bounds = array<i64: 3, 32>}, {pipeline_mode = #tpu.pipeline_mode<synchronous>, transform_indices = @transform_2, window_bounds = array<i64: 32, 1>}, {pipeline_mode = #tpu.pipeline_mode<synchronous>, transform_indices = @transform_3, window_bounds = array<i64: 32, 1>}, {transform_indices = @transform_4, window_bounds = array<i64: 1, 3, 128>}]} {
    %c0 = arith.constant 0 : index
    %c0_0 = arith.constant 0 : index
    %c0_1 = arith.constant 0 : index
    %0 = vector.load %arg2[%c0, %c0_0, %c0_1] : memref<1x32x128xbf16, #tpu.memory_space<vmem>>, vector<1x32x128xbf16>
    %1 = vector.shape_cast %0 : vector<1x32x128xbf16> to vector<32x128xbf16>
    %2 = arith.extf %1 : vector<32x128xbf16> to vector<32x128xf32>
    %c0_2 = arith.constant 0 : index
    %c0_3 = arith.constant 0 : index
    %3 = vector.load %arg4[%c0_2, %c0_3] : memref<32x1xf32, #tpu.memory_space<vmem>>, vector<32x1xf32>
    %4 = vector.broadcast %3 : vector<32x1xf32> to vector<32x128xf32>
    %5 = arith.mulf %2, %4 : vector<32x128xf32>
    %c0_4 = arith.constant 0 : index
    %c0_5 = arith.constant 0 : index
    %6 = vector.load %arg5[%c0_4, %c0_5] : memref<32x1xf32, #tpu.memory_space<vmem>>, vector<32x1xf32>
    %7 = vector.broadcast %6 : vector<32x1xf32> to vector<32x128xf32>
    %8 = arith.addf %5, %7 : vector<32x128xf32>
    %cst = arith.constant 0.000000e+00 : f32
    %9 = vector.broadcast %cst : f32 to vector<32x128xf32>
    %10 = arith.maximumf %8, %9 : vector<32x128xf32>
    %c0_6 = arith.constant 0 : index
    %c0_7 = arith.constant 0 : index
    %11 = vector.load %arg3[%c0_6, %c0_7] : memref<3x32xbf16, #tpu.memory_space<vmem>>, vector<3x32xbf16>
    %12 = arith.truncf %10 : vector<32x128xf32> to vector<32x128xbf16>
    %cst_8 = arith.constant dense<0.000000e+00> : vector<3x128xf32>
    %13 = tpu.matmul %11, %12, %cst_8 {dimension_numbers = #tpu.dot_dimension_numbers<[1], [0], [0], [1], [0, 0, 1, 1], [], []>} : vector<3x32xbf16>, vector<32x128xbf16>, vector<3x128xf32> -> vector<3x128xf32>
    %c0_9 = arith.constant 0 : index
    %c0_10 = arith.constant 0 : index
    %c0_11 = arith.constant 0 : index
    %14 = vector.load %arg6[%c0_9, %c0_10, %c0_11] : memref<1x3x128xf32, #tpu.memory_space<vmem>>, vector<1x3x128xf32>
    %15 = vector.shape_cast %14 : vector<1x3x128xf32> to vector<3x128xf32>
    %16 = vector.shape_cast %13 : vector<3x128xf32> to vector<1x3x128xf32>
    tpu.vector_store %arg6[%c0_9, %c0_10, %c0_11], %16 {strides = array<i32>} : memref<1x3x128xf32, #tpu.memory_space<vmem>>, vector<1x3x128xf32>,
    return
  }
  func.func @transform_0(%arg0: i32, %arg1: i32) -> (i32, i32, i32) {
    %c0_i32 = arith.constant 0 : i32
    %c0_i32_0 = arith.constant 0 : i32
    return %arg0, %c0_i32, %arg1 : i32, i32, i32
  }
  func.func @transform_1(%arg0: i32, %arg1: i32) -> (i32, i32) {
    %c0_i32 = arith.constant 0 : i32
    %c0_i32_0 = arith.constant 0 : i32
    %c0_i32_1 = arith.constant 0 : i32
    return %c0_i32, %c0_i32_0 : i32, i32
  }
  func.func @transform_2(%arg0: i32, %arg1: i32) -> (i32, i32) {
    %c0_i32 = arith.constant 0 : i32
    %c0_i32_0 = arith.constant 0 : i32
    %c0_i32_1 = arith.constant 0 : i32
    return %c0_i32, %c0_i32_0 : i32, i32
  }
  func.func @transform_3(%arg0: i32, %arg1: i32) -> (i32, i32) {
    %c0_i32 = arith.constant 0 : i32
    %c0_i32_0 = arith.constant 0 : i32
    %c0_i32_1 = arith.constant 0 : i32
    return %c0_i32, %c0_i32_0 : i32, i32
  }
  func.func @transform_4(%arg0: i32, %arg1: i32) -> (i32, i32, i32) {
    %c0_i32 = arith.constant 0 : i32
    %c0_i32_0 = arith.constant 0 : i32
    return %arg0, %c0_i32, %arg1 : i32, i32, i32
  }
}

</mosaic_0001>

<llo_original>
// kernel: flow_predictor_pallas.3
$region0: #{flow_predictor_pallas.3}
  #allocation0 [shape = 'u32[]', space=smem, size = 0x4, offset = 0x4, fixed_abs, tag = 'smem constant byte address 0x4 - core index']
  #allocation1 [shape = 'u32[144,128]{1,0:T(1,128)}', space=vmem, size = 0x12000, scoped, tag = 'internal scratch']
  %s0 = inlined_call_operand.vmem [shape: f32[2,4,256], index: 0, kind: input, shape index: {}]
  %s1 = inlined_call_operand.vmem [shape: bf16[32,4], index: 1, kind: input, shape index: {}]
  %s2 = inlined_call_operand.vmem [shape: bf16[2,32,256], index: 2, kind: output, shape index: {0}]
  %s3 = inlined_call_operand.vmem [shape: f32[2,2,32,2], index: 3, kind: output, shape index: {1}]
  %4 = xla_tuple %s2, %s3
  %s5 = sld [smem:[#allocation0]]
  $region86: #{flow_predictor_pallas.3} parent=0
    _
  %s7 = ssub.s32 1, %s5
  %s8 = scalar_select 0, %s7, %s5
  $region1: #{flow_predictor_pallas.3} parent=0
    #allocation2 [shape = 'u8[16384]{0}', space=vmem, size = 0x4000, scoped, tag = 'output window, operand 0']
    loop: start=0, step=1, limit=6
    $region2: #{flow_predictor_pallas.3} parent=1 // loop_pre_header
      _
    $region3: #{flow_predictor_pallas.3} parent=1 // loop_header
      %s10 = sphi 0, %s14
      %p11 = scmp.ge.s32.totalorder %s10, 6
      %s17 = sphi 0, %s29
      %s18 = sphi 0, %s25
      %s19 = sphi 0, %s17
      %s20 = sphi 0, %s18
      %s21 = sphi 0, %s19
      %s22 = sphi 0, %s20
      %s34 = sphi 0, %s36
      %s37 = sphi 0, %s34
      %s38 = sphi 0, %s37
      %s54 = sphi 0, %s38
      %s58 = sphi 0, %s58
      %s60 = sphi 0, %s58
      %s61 = sphi 0, %s60
      %s75 = sphi 0, %s61
      %s83 = sphi 0, %s85
      %s86 = sphi 0, %s83
      %s87 = sphi 0, %s86
      %s103 = sphi 0, %s87
      %s111 = sphi 0, %s113
      %s114 = sphi 0, %s111
      %s115 = sphi 0, %s114
      %s131 = sphi 0, %s115
    $region4: #{flow_predictor_pallas.3} parent=1 // loop_header_branch
      %13 = sbr.rel (%p11) target = $region8
    $region5: #{flow_predictor_pallas.3} parent=1 // loop_body
      %s15 = ssub.s32 %s10, 1
      %s16 = ssub.s32 %s10, 2
      %s23 = sadd.s32 1, %s18
      %p24 = scmp.ge.s32.totalorder %s23, 2
      %s25 = scalar_select %p24, 0, %s23
      %s26 = sadd.s32 1, %s17
      %s27 = scalar_select %p24, %s26, %s17
      %p28 = scmp.ge.s32.totalorder %s27, 2
      %s29 = scalar_select %p28, 0, %s27
      %s30 = ssub.s32 %s17, %s29
      %s31 = ssub.s32 %s18, %s25
      %s32 = sor.u32 %s30, %s31
      %p33 = scmp.eq.s32.totalorder %s32, 0
      %s35 = sadd.s32 %s34, 1
      %s36 = scalar_select %p33, %s34, %s35
      %p39 = pneg %p33
      %p40 = scmp.eq.s32.totalorder %s10, 3
      %p41 = por %p39, %p40
      %p42 = scmp.ne.s32.totalorder %s34, %s37
      %p43 = scmp.eq.s32.totalorder %s10, 0
      %p44 = por %p42, %p43
      %p45 = scmp.ne.s32.totalorder %s34, %s37
      %p46 = scmp.eq.s32.totalorder %s15, 3
      %p47 = por %p45, %p46
      %p48 = scmp.ne.s32.totalorder %s37, %s38
      %p49 = scmp.eq.s32.totalorder %s15, 0
      %p50 = por %p48, %p49
      %p51 = scmp.ne.s32.totalorder %s37, %s38
      %p52 = scmp.eq.s32.totalorder %s16, 3
      %p53 = por %p51, %p52
      %p55 = scmp.ne.s32.totalorder %s38, %s54
      %p56 = scmp.eq.s32.totalorder %s16, 0
      %p57 = por %p55, %p56
      %s59 = sadd.s32 %s58, 1
      %p62 = scmp.eq.s32.totalorder %s10, 3
      %p63 = scmp.ne.s32.totalorder %s58, %s60
      %p64 = scmp.eq.s32.totalorder %s10, 0
      %p65 = por %p63, %p64
      %p66 = scmp.ne.s32.totalorder %s58, %s60
      %p67 = scmp.eq.s32.totalorder %s15, 3
      %p68 = por %p66, %p67
      %p69 = scmp.ne.s32.totalorder %s60, %s61
      %p70 = scmp.eq.s32.totalorder %s15, 0
      %p71 = por %p69, %p70
      %p72 = scmp.ne.s32.totalorder %s60, %s61
      %p73 = scmp.eq.s32.totalorder %s16, 3
      %p74 = por %p72, %p73
      %p76 = scmp.ne.s32.totalorder %s61, %s75
      %p77 = scmp.eq.s32.totalorder %s16, 0
      %p78 = por %p76, %p77
      %s79 = ssub.s32 %s17, %s29
      %s80 = ssub.s32 %s18, %s25
      %s81 = sor.u32 %s79, %s80
      %p82 = scmp.eq.s32.totalorder %s81, 0
      %s84 = sadd.s32 %s83, 1
      %s85 = scalar_select %p82, %s83, %s84
      %p88 = pneg %p82
      %p89 = scmp.eq.s32.totalorder %s10, 3
      %p90 = por %p88, %p89
      %p91 = scmp.ne.s32.totalorder %s83, %s86
      %p92 = scmp.eq.s32.totalorder %s10, 0
      %p93 = por %p91, %p92
      %p94 = scmp.ne.s32.totalorder %s83, %s86
      %p95 = scmp.eq.s32.totalorder %s15, 3
      %p96 = por %p94, %p95
      %p97 = scmp.ne.s32.totalorder %s86, %s87
      %p98 = scmp.eq.s32.totalorder %s15, 0
      %p99 = por %p97, %p98
      %p100 = scmp.ne.s32.totalorder %s86, %s87
      %p101 = scmp.eq.s32.totalorder %s16, 3
      %p102 = por %p100, %p101
      %p104 = scmp.ne.s32.totalorder %s87, %s103
      %p105 = scmp.eq.s32.totalorder %s16, 0
      %p106 = por %p104, %p105
      %s107 = ssub.s32 %s17, %s29
      %s108 = ssub.s32 %s18, %s25
      %s109 = sor.u32 %s107, %s108
      %p110 = scmp.eq.s32.totalorder %s109, 0
      %s112 = sadd.s32 %s111, 1
      %s113 = scalar_select %p110, %s111, %s112
      %p116 = pneg %p110
      %p117 = scmp.eq.s32.totalorder %s10, 3
      %p118 = por %p116, %p117
      %p119 = scmp.ne.s32.totalorder %s111, %s114
      %p120 = scmp.eq.s32.totalorder %s10, 0
      %p121 = por %p119, %p120
      %p122 = scmp.ne.s32.totalorder %s111, %s114
      %p123 = scmp.eq.s32.totalorder %s15, 3
      %p124 = por %p122, %p123
      %p125 = scmp.ne.s32.totalorder %s114, %s115
      %p126 = scmp.eq.s32.totalorder %s15, 0
      %p127 = por %p125, %p126
      %p128 = scmp.ne.s32.totalorder %s114, %s115
      %p129 = scmp.eq.s32.totalorder %s16, 3
      %p130 = por %p128, %p129
      %p132 = scmp.ne.s32.totalorder %s115, %s131
      %p133 = scmp.eq.s32.totalorder %s16, 0
      %p134 = por %p132, %p133
      %p135 = scmp.le.s32.totalorder 1, %s10
      %p136 = scmp.lt.s32.totalorder %s10, 5
      %p137 = pnand %p135, %p136
      %p138 = pneg %p137
      // Predicated region
      $region9: #{flow_predictor_pallas.3} parent=5 // pred_check
        _
      $region10: #{flow_predictor_pallas.3} parent=5 // pred_check_branch
        %140 = sbr.rel (%p137) target = $region12
      $region11: #{flow_predictor_pallas.3} parent=5 // pred_region
        %s141 = ssub.s32 %s10, 1
        // Predicated region
        $region13: #{flow_predictor_pallas.3} parent=11 // pred_check
          %p142 = pneg %p71
        $region14: #{flow_predictor_pallas.3} parent=11 // pred_check_branch
          %144 = sbr.rel (%p142) target = $region16
        $region15: #{flow_predictor_pallas.3} parent=11 // pred_region
          _
        $region16: #{flow_predictor_pallas.3} parent=11 // pred_fallthru
          _
      $region12: #{flow_predictor_pallas.3} parent=5 // pred_fallthru
        _
      %p145 = scmp.lt.s32.totalorder %s10, 4
      // Predicated region
      $region17: #{flow_predictor_pallas.3} parent=5 // pred_check
        %p146 = pneg %p145
      $region18: #{flow_predictor_pallas.3} parent=5 // pred_check_branch
        %148 = sbr.rel (%p146) target = $region20
      $region19: #{flow_predictor_pallas.3} parent=5 // pred_region
        // Predicated region
        $region21: #{flow_predictor_pallas.3} parent=19 // pred_check
          %p149 = pneg %p44
        $region22: #{flow_predictor_pallas.3} parent=19 // pred_check_branch
          %151 = sbr.rel (%p149) target = $region24
        $region23: #{flow_predictor_pallas.3} parent=19 // pred_region
          %p152 = scmp.lt.s32.totalorder %s17, 1
          %s153 = scalar_select %p152, %s17, 1
          %p154 = scmp.lt.s32.totalorder %s18, 1
          %s155 = scalar_select %p154, %s18, 1
          %s156 = smul.addr %s153, 2
          %s157 = sadd.s32 %s155, %s156
          %s158 = smul.addr %s157, 4
          %s159 = scalar_lea.vmem %s0, %s158
        $region24: #{flow_predictor_pallas.3} parent=19 // pred_fallthru
          _
      $region20: #{flow_predictor_pallas.3} parent=5 // pred_fallthru
        _
      %p160 = scmp.le.s32.totalorder 1, %s10
      %p161 = scmp.lt.s32.totalorder %s10, 5
      %p162 = pnand %p160, %p161
      %p163 = pneg %p162
      // Predicated region
      $region25: #{flow_predictor_pallas.3} parent=5 // pred_check
        _
      $region26: #{flow_predictor_pallas.3} parent=5 // pred_check_branch
        %165 = sbr.rel (%p162) target = $region28
      $region27: #{flow_predictor_pallas.3} parent=5 // pred_region
        %s166 = ssub.s32 %s10, 1
        %p167 = scmp.lt.s32.totalorder %s19, 1
        %s168 = scalar_select %p167, %s19, 1
        %p169 = scmp.lt.s32.totalorder %s20, 1
        %s170 = scalar_select %p169, %s20, 1
        %s171 = smul.addr %s168, 2
        %s172 = sadd.s32 %s170, %s171
        %s173 = smul.addr %s172, 4
        %s174 = scalar_lea.vmem %s0, %s173
        %p175 = pneg %p50
        %p176 = pneg %p47
        %p177 = pneg %p71
        %p178 = pneg %p68
        %p179 = pneg %p99
        %p180 = pneg %p96
        %s181 = sand.u32 %s86, 1
        %s182 = sand.u32 %s86, 1
        %s183 = smul.addr %s182, 16
        %s184 = scalar_lea.vmem [#allocation2], %s183
        %p185 = pneg %p127
        %p186 = pneg %p124
        %p187 = scmp.lt.s32.totalorder %s19, 1
        %s188 = scalar_select %p187, %s19, 1
        %p189 = scmp.lt.s32.totalorder %s20, 1
        %s190 = scalar_select %p189, %s20, 1
        %s191 = smul.addr %s190, 4
        %s192 = smul.addr %s188, 8
        %s193 = sadd.s32 %s191, %s192
        %s194 = smul.addr %s193, 8
        %s195 = scalar_lea.vmem %s3, %s194
        %p196 = scmp.lt.s32.totalorder %s19, 1
        %s197 = scalar_select %p196, %s19, 1
        %p198 = scmp.lt.s32.totalorder %s20, 1
        %s199 = scalar_select %p198, %s20, 1
        %s200 = smul.addr %s197, 2
        %s201 = sadd.s32 %s199, %s200
        %s202 = smul.addr %s201, 4
        %s203 = scalar_lea.vmem %s0, %s202
        %p204 = scmp.lt.s32.totalorder %s19, 1
        %s205 = scalar_select %p204, %s19, 1
        %p206 = scmp.lt.s32.totalorder %s20, 1
        %s207 = scalar_select %p206, %s20, 1
        %s208 = smul.addr %s207, 4
        %s209 = smul.addr %s205, 8
        %s210 = sadd.s32 %s208, %s209
        %s211 = smul.addr %s210, 8
        %s212 = scalar_lea.vmem %s3, %s211
        %v214 = vld [vmem:[%s203] sm:$0xf]
        %v215 = vpack.c.bf16 %v214, %v214
        %v216 = vld [vmem:[%s1] sm:$0xf]
        %v217 = vld [vmem:[%s1 + $0x4] sm:$0xf]
        %v218 = vld [vmem:[%s1 + $0x8] sm:$0xf]
        %v219 = vld [vmem:[%s1 + $0xc] sm:$0xf]
        %v224 = vunpack.c.l.b16 %v216
        %v225 = vunpack.c.l.b16 %v217
        %v226 = vunpack.c.l.b16 %v218
        %v227 = vunpack.c.l.b16 %v219
        %v228 = vpack.c.b16 %v225, %v224
        %v229 = vpack.c.b16 %v227, %v226
        %vm230 = vcmask 31744
        %v232 = vsel %vm230, %v228, 0
        %v235 = vsel %vm230, %v229, 0
        %vm237 = vcmask 1041408
        %v239 = vsel %vm237, %v215, 0
        %241 = vmatprep.subr.bf16.mxu0 0
        %242 = vmatpush1.bf16.msra.mxu0 0
        %243 = vmatprep.subr.bf16.mxu0 0
        %244 = vmatpush1.bf16.msra.mxu0 0
        %245 = vmatprep.subr.bf16.mxu0 0
        %246 = vmatpush1.bf16.msra.mxu0 0
        %247 = vmatprep.subr.bf16.mxu0 0
        %248 = vmatpush1.bf16.msra.mxu0 0
        %249 = vmatprep.subr.bf16.mxu0 0
        %250 = vmatpush1.bf16.msra.mxu0 0
        %251 = vmatprep.subr.bf16.mxu0 0
        %252 = vmatpush1.bf16.msra.mxu0 0
        %253 = vmatprep.subr.bf16.mxu0 0
        %254 = vmatpush1.bf16.msra.mxu0 0
        %255 = vmatprep.subr.bf16.mxu0 0
        %256 = vmatpush1.bf16.msra.mxu0 %v239
        %257 = vmatprep.subr.bf16.mxu0 0
        %258 = vmatpush2.bf16.msra.mxu0 0
        %259 = vmatprep.subr.bf16.mxu0 0
        %260 = vmatpush2.bf16.msra.mxu0 0
        %261 = vmatprep.subr.bf16.mxu0 0
        %262 = vmatpush2.bf16.msra.mxu0 0
        %263 = vmatprep.subr.bf16.mxu0 0
        %264 = vmatpush2.bf16.msra.mxu0 0
        %265 = vmatprep.subr.bf16.mxu0 0
        %266 = vmatpush2.bf16.msra.mxu0 0
        %267 = vmatprep.subr.bf16.mxu0 0
        %268 = vmatpush2.bf16.msra.mxu0 0
        %269 = vmatprep.subr.bf16.mxu0 0
        %270 = vmatpush2.bf16.msra.mxu0 0
        %271 = vmatprep.subr.bf16.mxu0 0
        %272 = vmatpush2.bf16.msra.mxu0 0
        %273 = vmatprep.mubr.bf16.mxu0 0
        %274 = vmatmul.mubr.bf16.gmra.mxu0 %v232
        %v275 = vpop.f32.mrf.mxu0
        %v276 = vadd.f32 0.0, %v275
        %v277 = vpop.f32.mrf.mxu0
        %v278 = vpop.f32.mrf.mxu0
        %v279 = vadd.f32 0.0, %v278
        %v280 = vpop.f32.mrf.mxu0
        %281 = vmatprep.mubr.bf16.mxu0 0
        %282 = vmatmul.mubr.bf16.gmra.mxu0 %v235
        %v283 = vpop.f32.mrf.mxu0
        %v284 = vadd.f32 0.0, %v283
        %v285 = vpop.f32.mrf.mxu0
        %v286 = vpop.f32.mrf.mxu0
        %v287 = vadd.f32 0.0, %v286
        %v288 = vpop.f32.mrf.mxu0
        %289 = vdwg.mxu0
        %v290 = vpack.c.bf16 %v279, %v276
        %v291 = vpack.c.bf16 %v287, %v284
        %v294 = vunpack.c.l.b16 %v290
        %v295 = vunpack.c.h.b16 %v290
        %v296 = vunpack.c.l.b16 %v291
        %v297 = vunpack.c.h.b16 %v291
        %v298 = vpack.c.b16 %v294, %v294
        %v299 = vpack.c.b16 %v295, %v295
        %v300 = vpack.c.b16 %v296, %v296
        %v301 = vpack.c.b16 %v297, %v297
        %306 = vst [vmem:[%s184] sm:$0xf] %v298
        %307 = vst [vmem:[%s184 + $0x4] sm:$0xf] %v299
        %308 = vst [vmem:[%s184 + $0x8] sm:$0xf] %v300
        %309 = vst [vmem:[%s184 + $0xc] sm:$0xf] %v301
        %v310 = vlaneseq
        %v311 = vand.u32 %v310, 127
        %s312 = smul.u32 %s20, 128
        %v313 = vstv %s312
        %v314 = vadd.s32 %v313, %v311
        %vm315 = vcmp.lt.s32.totalorder %v314, 200
        %v316 = vsel %vm315, 1, 0
        %v317 = vcvt.s32.f32 %v316
        %v318 = vmul.f32 %v276, %v317
        %v319 = vmul.f32 %v279, %v317
        %v320 = vmul.f32 %v284, %v317
        %v321 = vmul.f32 %v287, %v317
        %322 = vadd.xlane.f32.xlu0 %v318
        %v323 = vpop.xlane.xlu0 %322
        %324 = vadd.xlane.f32.xlu0 %v319
        %v325 = vpop.xlane.xlu0 %324
        %326 = vadd.xlane.f32.xlu0 %v320
        %v327 = vpop.xlane.xlu0 %326
        %328 = vadd.xlane.f32.xlu0 %v321
        %v329 = vpop.xlane.xlu0 %328
        %vm330 = vcmask 7168
        %331 = vst.msk [vmem:[%s212] sm:$0xff] %vm330, %v323
        %332 = vst.msk [vmem:[%s212 + $0x8] sm:$0xff] %vm330, %v325
        %333 = vst.msk [vmem:[%s212 + $0x10] sm:$0xff] %vm330, %v327
        %334 = vst.msk [vmem:[%s212 + $0x18] sm:$0xff] %vm330, %v329
        %v335 = vmul.f32 %v318, %v276
        %v336 = vmul.f32 %v319, %v279
        %v337 = vmul.f32 %v320, %v284
        %v338 = vmul.f32 %v321, %v287
        %339 = vadd.xlane.f32.xlu0 %v335
        %v340 = vpop.xlane.xlu0 %339
        %341 = vadd.xlane.f32.xlu0 %v336
        %v342 = vpop.xlane.xlu0 %341
        %343 = vadd.xlane.f32.xlu0 %v337
        %v344 = vpop.xlane.xlu0 %343
        %345 = vadd.xlane.f32.xlu0 %v338
        %v346 = vpop.xlane.xlu0 %345
        %vm347 = vcmask 15368
        %348 = vst.msk [vmem:[%s212] sm:$0xff] %vm347, %v340
        %349 = vst.msk [vmem:[%s212 + $0x8] sm:$0xff] %vm347, %v342
        %350 = vst.msk [vmem:[%s212 + $0x10] sm:$0xff] %vm347, %v344
        %351 = vst.msk [vmem:[%s212 + $0x18] sm:$0xff] %vm347, %v346
        %s352 = sand.u32 %s86, 1
        %s353 = sand.u32 %s86, 1
        %s354 = smul.addr %s353, 16
        %s355 = scalar_lea.vmem [#allocation2], %s354
        %p356 = scmp.lt.s32.totalorder %s19, 1
        %s357 = scalar_select %p356, %s19, 1
        %p358 = scmp.lt.s32.totalorder %s20, 1
        %s359 = scalar_select %p358, %s20, 1
        %s360 = smul.addr %s359, 4
        %s361 = smul.addr %s357, 8
        %s362 = sadd.s32 %s360, %s361
        %s363 = smul.addr %s362, 8
        %s364 = scalar_lea.vmem %s3, %s363
        // Predicated region
        $region29: #{flow_predictor_pallas.3} parent=27 // pred_check
          %p365 = pneg %p96
        $region30: #{flow_predictor_pallas.3} parent=27 // pred_check_branch
          %367 = sbr.rel (%p365) target = $region32
        $region31: #{flow_predictor_pallas.3} parent=27 // pred_region
          %s368 = smul.addr %s19, 8
          %s369 = sadd.s32 %s20, %s368
          %s370 = smul.addr %s369, 4
          %s371 = scalar_lea.vmem %s2, %s370
          // Predicated region
          $region33: #{flow_predictor_pallas.3} parent=31 // pred_check
            _
          $region34: #{flow_predictor_pallas.3} parent=31 // pred_check_branch
            %373 = sbr.rel (0) target = $region36
          $region35: #{flow_predictor_pallas.3} parent=31 // pred_region
            // Predicated region
            $region37: #{flow_predictor_pallas.3} parent=35 // pred_check
              _
            $region38: #{flow_predictor_pallas.3} parent=35 // pred_check_branch
              %375 = sbr.rel target = $region40
            $region39: #{flow_predictor_pallas.3} parent=35 // pred_region
              // Predicated region
              $region52: #{flow_predictor_pallas.3} parent=39 // pred_check
                _
              $region53: #{flow_predictor_pallas.3} parent=39 // pred_check_branch
                %397 = sbr.rel (0) target = $region55
              $region54: #{flow_predictor_pallas.3} parent=39 // pred_region
                loop: start=0, step=1, limit=1
                $region56: #{flow_predictor_pallas.3} parent=54 // loop_pre_header
                  _
                $region57: #{flow_predictor_pallas.3} parent=54 // loop_header
                  %s399 = sphi 0, %s403
                  %p400 = scmp.ge.s32.totalorder %s399, 1
                  %s404 = sphi %s355, %s355
                  %s405 = sphi %s371, %s371
                $region58: #{flow_predictor_pallas.3} parent=54 // loop_header_branch
                  %402 = sbr.rel (%p400) target = $region62
                $region59: #{flow_predictor_pallas.3} parent=54 // loop_body
                  _
                $region60: #{flow_predictor_pallas.3} parent=54 // loop_footer
                  %s403 = sadd.s32 1, %s399
                $region61: #{flow_predictor_pallas.3} parent=54 // loop_footer_branch
                  %398 = sbr.rel target = $region57
                $region62: #{flow_predictor_pallas.3} parent=54 // loop_exit
                  _
                %s407 = ssub.s32 16, 1
                loop: start=0, step=1, limit=1
                $region63: #{flow_predictor_pallas.3} parent=54 // loop_pre_header
                  _
                $region64: #{flow_predictor_pallas.3} parent=54 // loop_header
                  %s409 = sphi 0, %s413
                  %p410 = scmp.ge.s32.totalorder %s409, 1
                  %s414 = sphi %s355, %s355
                  %s415 = sphi %s371, %s371
                $region65: #{flow_predictor_pallas.3} parent=54 // loop_header_branch
                  %412 = sbr.rel (%p410) target = $region69
                $region66: #{flow_predictor_pallas.3} parent=54 // loop_body
                  %v416 = vld [vmem:[%s414] sm:%s407]
                  %417 = vst [vmem:[%s415] sm:%s407] %v416
                  %v418 = vld [vmem:[%s414 + $0x4] sm:%s407]
                  %419 = vst [vmem:[%s415 + $0x8] sm:%s407] %v418
                  %v420 = vld [vmem:[%s414 + $0x8] sm:%s407]
                  %421 = vst [vmem:[%s415 + $0x10] sm:%s407] %v420
                  %v422 = vld [vmem:[%s414 + $0xc] sm:%s407]
                  %423 = vst [vmem:[%s415 + $0x18] sm:%s407] %v422
                $region67: #{flow_predictor_pallas.3} parent=54 // loop_footer
                  %s413 = sadd.s32 1, %s409
                $region68: #{flow_predictor_pallas.3} parent=54 // loop_footer_branch
                  %408 = sbr.rel target = $region64
                $region69: #{flow_predictor_pallas.3} parent=54 // loop_exit
                  _
              $region55: #{flow_predictor_pallas.3} parent=39 // pred_fallthru
                _
            $region40: #{flow_predictor_pallas.3} parent=35 // pred_fallthru
              _
            // Predicated region
            $region41: #{flow_predictor_pallas.3} parent=35 // pred_check
              _
            $region42: #{flow_predictor_pallas.3} parent=35 // pred_check_branch
              %377 = sbr.rel (0) target = $region44
            $region43: #{flow_predictor_pallas.3} parent=35 // pred_region
              %s379 = ssub.s32 16, 1
              loop: start=0, step=1, limit=1
              $region45: #{flow_predictor_pallas.3} parent=43 // loop_pre_header
                _
              $region46: #{flow_predictor_pallas.3} parent=43 // loop_header
                %s381 = sphi 0, %s385
                %p382 = scmp.ge.s32.totalorder %s381, 1
                %s386 = sphi %s355, %s355
                %s387 = sphi %s371, %s371
              $region47: #{flow_predictor_pallas.3} parent=43 // loop_header_branch
                %384 = sbr.rel (%p382) target = $region51
              $region48: #{flow_predictor_pallas.3} parent=43 // loop_body
                %v388 = vld [vmem:[%s386] sm:%s379]
                %389 = vst [vmem:[%s387] sm:%s379] %v388
                %v390 = vld [vmem:[%s386 + $0x4] sm:%s379]
                %391 = vst [vmem:[%s387 + $0x8] sm:%s379] %v390
                %v392 = vld [vmem:[%s386 + $0x8] sm:%s379]
                %393 = vst [vmem:[%s387 + $0x10] sm:%s379] %v392
                %v394 = vld [vmem:[%s386 + $0xc] sm:%s379]
                %395 = vst [vmem:[%s387 + $0x18] sm:%s379] %v394
              $region49: #{flow_predictor_pallas.3} parent=43 // loop_footer
                %s385 = sadd.s32 1, %s381
              $region50: #{flow_predictor_pallas.3} parent=43 // loop_footer_branch
                %380 = sbr.rel target = $region46
              $region51: #{flow_predictor_pallas.3} parent=43 // loop_exit
                _
            $region44: #{flow_predictor_pallas.3} parent=35 // pred_fallthru
              _
          $region36: #{flow_predictor_pallas.3} parent=31 // pred_fallthru
            _
          %424 = vnop
        $region32: #{flow_predictor_pallas.3} parent=27 // pred_fallthru
          _
        // Predicated region
        $region70: #{flow_predictor_pallas.3} parent=27 // pred_check
          %p425 = pneg %p124
        $region71: #{flow_predictor_pallas.3} parent=27 // pred_check_branch
          %427 = sbr.rel (%p425) target = $region73
        $region72: #{flow_predictor_pallas.3} parent=27 // pred_region
          _
        $region73: #{flow_predictor_pallas.3} parent=27 // pred_fallthru
          _
      $region28: #{flow_predictor_pallas.3} parent=5 // pred_fallthru
        _
      %p428 = scmp.le.s32.totalorder 2, %s10
      // Predicated region
      $region74: #{flow_predictor_pallas.3} parent=5 // pred_check
        %p429 = pneg %p428
      $region75: #{flow_predictor_pallas.3} parent=5 // pred_check_branch
        %431 = sbr.rel (%p429) target = $region77
      $region76: #{flow_predictor_pallas.3} parent=5 // pred_region
        %s432 = ssub.s32 %s10, 2
        // Predicated region
        $region78: #{flow_predictor_pallas.3} parent=76 // pred_check
          %p433 = pneg %p102
        $region79: #{flow_predictor_pallas.3} parent=76 // pred_check_branch
          %435 = sbr.rel (%p433) target = $region81
        $region80: #{flow_predictor_pallas.3} parent=76 // pred_region
          %s436 = sand.u32 %s87, 1
          %s437 = sand.u32 %s87, 1
          %s438 = smul.addr %s437, 16
          %s439 = scalar_lea.vmem [#allocation2], %s438
        $region81: #{flow_predictor_pallas.3} parent=76 // pred_fallthru
          _
        // Predicated region
        $region82: #{flow_predictor_pallas.3} parent=76 // pred_check
          %p440 = pneg %p130
        $region83: #{flow_predictor_pallas.3} parent=76 // pred_check_branch
          %442 = sbr.rel (%p440) target = $region85
        $region84: #{flow_predictor_pallas.3} parent=76 // pred_region
          %p443 = scmp.lt.s32.totalorder %s21, 1
          %s444 = scalar_select %p443, %s21, 1
          %p445 = scmp.lt.s32.totalorder %s22, 1
          %s446 = scalar_select %p445, %s22, 1
          %s447 = smul.addr %s446, 4
          %s448 = smul.addr %s444, 8
          %s449 = sadd.s32 %s447, %s448
          %s450 = smul.addr %s449, 8
          %s451 = scalar_lea.vmem %s3, %s450
        $region85: #{flow_predictor_pallas.3} parent=76 // pred_fallthru
          _
      $region77: #{flow_predictor_pallas.3} parent=5 // pred_fallthru
        _
    $region6: #{flow_predictor_pallas.3} parent=1 // loop_footer
      %s14 = sadd.s32 1, %s10
    $region7: #{flow_predictor_pallas.3} parent=1 // loop_footer_branch
      %9 = sbr.rel target = $region3
    $region8: #{flow_predictor_pallas.3} parent=1 // loop_exit
      _

// kernel: flow_predictor_pallas.4
$region0: #{flow_predictor_pallas.4}
  #allocation0 [shape = 'u32[]', space=smem, size = 0x4, offset = 0x4, fixed_abs, tag = 'smem constant byte address 0x4 - core index']
  #allocation1 [shape = 'u32[144,128]{1,0:T(1,128)}', space=vmem, size = 0x12000, scoped, tag = 'internal scratch']
  %s0 = inlined_call_operand.vmem [shape: bf16[2,32,256], index: 0, kind: input, shape index: {}]
  %s1 = inlined_call_operand.vmem [shape: bf16[32,32], index: 1, kind: input, shape index: {}]
  %s2 = inlined_call_operand.vmem [shape: f32[32,1], index: 2, kind: input, shape index: {}]
  %s3 = inlined_call_operand.vmem [shape: f32[32,1], index: 3, kind: input, shape index: {}]
  %s4 = inlined_call_operand.vmem [shape: bf16[2,32,256], index: 4, kind: output, shape index: {0}]
  %s5 = inlined_call_operand.vmem [shape: f32[2,2,32,2], index: 5, kind: output, shape index: {1}]
  %6 = xla_tuple %s4, %s5
  %s7 = sld [smem:[#allocation0]]
  $region135: #{flow_predictor_pallas.4} parent=0
    _
  %s9 = ssub.s32 1, %s7
  %s10 = scalar_select 0, %s9, %s7
  $region1: #{flow_predictor_pallas.4} parent=0
    #allocation2 [shape = 'u8[16384]{0}', space=vmem, size = 0x4000, scoped, tag = 'input window, operand 0']
    #allocation3 [shape = 'u8[16384]{0}', space=vmem, size = 0x4000, scoped, tag = 'output window, operand 0']
    loop: start=0, step=1, limit=6
    $region2: #{flow_predictor_pallas.4} parent=1 // loop_pre_header
      _
    $region3: #{flow_predictor_pallas.4} parent=1 // loop_header
      %s12 = sphi 0, %s16
      %p13 = scmp.ge.s32.totalorder %s12, 6
      %s19 = sphi 0, %s31
      %s20 = sphi 0, %s27
      %s21 = sphi 0, %s19
      %s22 = sphi 0, %s20
      %s23 = sphi 0, %s21
      %s24 = sphi 0, %s22
      %s36 = sphi 0, %s38
      %s39 = sphi 0, %s36
      %s40 = sphi 0, %s39
      %s56 = sphi 0, %s40
      %s60 = sphi 0, %s60
      %s62 = sphi 0, %s60
      %s63 = sphi 0, %s62
      %s77 = sphi 0, %s63
      %s81 = sphi 0, %s81
      %s83 = sphi 0, %s81
      %s84 = sphi 0, %s83
      %s98 = sphi 0, %s84
      %s102 = sphi 0, %s102
      %s104 = sphi 0, %s102
      %s105 = sphi 0, %s104
      %s119 = sphi 0, %s105
      %s127 = sphi 0, %s129
      %s130 = sphi 0, %s127
      %s131 = sphi 0, %s130
      %s147 = sphi 0, %s131
      %s155 = sphi 0, %s157
      %s158 = sphi 0, %s155
      %s159 = sphi 0, %s158
      %s175 = sphi 0, %s159
    $region4: #{flow_predictor_pallas.4} parent=1 // loop_header_branch
      %15 = sbr.rel (%p13) target = $region8
    $region5: #{flow_predictor_pallas.4} parent=1 // loop_body
      %s17 = ssub.s32 %s12, 1
      %s18 = ssub.s32 %s12, 2
      %s25 = sadd.s32 1, %s20
      %p26 = scmp.ge.s32.totalorder %s25, 2
      %s27 = scalar_select %p26, 0, %s25
      %s28 = sadd.s32 1, %s19
      %s29 = scalar_select %p26, %s28, %s19
      %p30 = scmp.ge.s32.totalorder %s29, 2
      %s31 = scalar_select %p30, 0, %s29
      %s32 = ssub.s32 %s19, %s31
      %s33 = ssub.s32 %s20, %s27
      %s34 = sor.u32 %s32, %s33
      %p35 = scmp.eq.s32.totalorder %s34, 0
      %s37 = sadd.s32 %s36, 1
      %s38 = scalar_select %p35, %s36, %s37
      %p41 = pneg %p35
      %p42 = scmp.eq.s32.totalorder %s12, 3
      %p43 = por %p41, %p42
      %p44 = scmp.ne.s32.totalorder %s36, %s39
      %p45 = scmp.eq.s32.totalorder %s12, 0
      %p46 = por %p44, %p45
      %p47 = scmp.ne.s32.totalorder %s36, %s39
      %p48 = scmp.eq.s32.totalorder %s17, 3
      %p49 = por %p47, %p48
      %p50 = scmp.ne.s32.totalorder %s39, %s40
      %p51 = scmp.eq.s32.totalorder %s17, 0
      %p52 = por %p50, %p51
      %p53 = scmp.ne.s32.totalorder %s39, %s40
      %p54 = scmp.eq.s32.totalorder %s18, 3
      %p55 = por %p53, %p54
      %p57 = scmp.ne.s32.totalorder %s40, %s56
      %p58 = scmp.eq.s32.totalorder %s18, 0
      %p59 = por %p57, %p58
      %s61 = sadd.s32 %s60, 1
      %p64 = scmp.eq.s32.totalorder %s12, 3
      %p65 = scmp.ne.s32.totalorder %s60, %s62
      %p66 = scmp.eq.s32.totalorder %s12, 0
      %p67 = por %p65, %p66
      %p68 = scmp.ne.s32.totalorder %s60, %s62
      %p69 = scmp.eq.s32.totalorder %s17, 3
      %p70 = por %p68, %p69
      %p71 = scmp.ne.s32.totalorder %s62, %s63
      %p72 = scmp.eq.s32.totalorder %s17, 0
      %p73 = por %p71, %p72
      %p74 = scmp.ne.s32.totalorder %s62, %s63
      %p75 = scmp.eq.s32.totalorder %s18, 3
      %p76 = por %p74, %p75
      %p78 = scmp.ne.s32.totalorder %s63, %s77
      %p79 = scmp.eq.s32.totalorder %s18, 0
      %p80 = por %p78, %p79
      %s82 = sadd.s32 %s81, 1
      %p85 = scmp.eq.s32.totalorder %s12, 3
      %p86 = scmp.ne.s32.totalorder %s81, %s83
      %p87 = scmp.eq.s32.totalorder %s12, 0
      %p88 = por %p86, %p87
      %p89 = scmp.ne.s32.totalorder %s81, %s83
      %p90 = scmp.eq.s32.totalorder %s17, 3
      %p91 = por %p89, %p90
      %p92 = scmp.ne.s32.totalorder %s83, %s84
      %p93 = scmp.eq.s32.totalorder %s17, 0
      %p94 = por %p92, %p93
      %p95 = scmp.ne.s32.totalorder %s83, %s84
      %p96 = scmp.eq.s32.totalorder %s18, 3
      %p97 = por %p95, %p96
      %p99 = scmp.ne.s32.totalorder %s84, %s98
      %p100 = scmp.eq.s32.totalorder %s18, 0
      %p101 = por %p99, %p100
      %s103 = sadd.s32 %s102, 1
      %p106 = scmp.eq.s32.totalorder %s12, 3
      %p107 = scmp.ne.s32.totalorder %s102, %s104
      %p108 = scmp.eq.s32.totalorder %s12, 0
      %p109 = por %p107, %p108
      %p110 = scmp.ne.s32.totalorder %s102, %s104
      %p111 = scmp.eq.s32.totalorder %s17, 3
      %p112 = por %p110, %p111
      %p113 = scmp.ne.s32.totalorder %s104, %s105
      %p114 = scmp.eq.s32.totalorder %s17, 0
      %p115 = por %p113, %p114
      %p116 = scmp.ne.s32.totalorder %s104, %s105
      %p117 = scmp.eq.s32.totalorder %s18, 3
      %p118 = por %p116, %p117
      %p120 = scmp.ne.s32.totalorder %s105, %s119
      %p121 = scmp.eq.s32.totalorder %s18, 0
      %p122 = por %p120, %p121
      %s123 = ssub.s32 %s19, %s31
      %s124 = ssub.s32 %s20, %s27
      %s125 = sor.u32 %s123, %s124
      %p126 = scmp.eq.s32.totalorder %s125, 0
      %s128 = sadd.s32 %s127, 1
      %s129 = scalar_select %p126, %s127, %s128
      %p132 = pneg %p126
      %p133 = scmp.eq.s32.totalorder %s12, 3
      %p134 = por %p132, %p133
      %p135 = scmp.ne.s32.totalorder %s127, %s130
      %p136 = scmp.eq.s32.totalorder %s12, 0
      %p137 = por %p135, %p136
      %p138 = scmp.ne.s32.totalorder %s127, %s130
      %p139 = scmp.eq.s32.totalorder %s17, 3
      %p140 = por %p138, %p139
      %p141 = scmp.ne.s32.totalorder %s130, %s131
      %p142 = scmp.eq.s32.totalorder %s17, 0
      %p143 = por %p141, %p142
      %p144 = scmp.ne.s32.totalorder %s130, %s131
      %p145 = scmp.eq.s32.totalorder %s18, 3
      %p146 = por %p144, %p145
      %p148 = scmp.ne.s32.totalorder %s131, %s147
      %p149 = scmp.eq.s32.totalorder %s18, 0
      %p150 = por %p148, %p149
      %s151 = ssub.s32 %s19, %s31
      %s152 = ssub.s32 %s20, %s27
      %s153 = sor.u32 %s151, %s152
      %p154 = scmp.eq.s32.totalorder %s153, 0
      %s156 = sadd.s32 %s155, 1
      %s157 = scalar_select %p154, %s155, %s156
      %p160 = pneg %p154
      %p161 = scmp.eq.s32.totalorder %s12, 3
      %p162 = por %p160, %p161
      %p163 = scmp.ne.s32.totalorder %s155, %s158
      %p164 = scmp.eq.s32.totalorder %s12, 0
      %p165 = por %p163, %p164
      %p166 = scmp.ne.s32.totalorder %s155, %s158
      %p167 = scmp.eq.s32.totalorder %s17, 3
      %p168 = por %p166, %p167
      %p169 = scmp.ne.s32.totalorder %s158, %s159
      %p170 = scmp.eq.s32.totalorder %s17, 0
      %p171 = por %p169, %p170
      %p172 = scmp.ne.s32.totalorder %s158, %s159
      %p173 = scmp.eq.s32.totalorder %s18, 3
      %p174 = por %p172, %p173
      %p176 = scmp.ne.s32.totalorder %s159, %s175
      %p177 = scmp.eq.s32.totalorder %s18, 0
      %p178 = por %p176, %p177
      %p179 = scmp.le.s32.totalorder 1, %s12
      %p180 = scmp.lt.s32.totalorder %s12, 5
      %p181 = pnand %p179, %p180
      %p182 = pneg %p181
      // Predicated region
      $region9: #{flow_predictor_pallas.4} parent=5 // pred_check
        _
      $region10: #{flow_predictor_pallas.4} parent=5 // pred_check_branch
        %184 = sbr.rel (%p181) target = $region12
      $region11: #{flow_predictor_pallas.4} parent=5 // pred_region
        %s185 = ssub.s32 %s12, 1
        // Predicated region
        $region13: #{flow_predictor_pallas.4} parent=11 // pred_check
          %p186 = pneg %p73
        $region14: #{flow_predictor_pallas.4} parent=11 // pred_check_branch
          %188 = sbr.rel (%p186) target = $region16
        $region15: #{flow_predictor_pallas.4} parent=11 // pred_region
          _
        $region16: #{flow_predictor_pallas.4} parent=11 // pred_fallthru
          _
        // Predicated region
        $region17: #{flow_predictor_pallas.4} parent=11 // pred_check
          %p189 = pneg %p94
        $region18: #{flow_predictor_pallas.4} parent=11 // pred_check_branch
          %191 = sbr.rel (%p189) target = $region20
        $region19: #{flow_predictor_pallas.4} parent=11 // pred_region
          _
        $region20: #{flow_predictor_pallas.4} parent=11 // pred_fallthru
          _
        // Predicated region
        $region21: #{flow_predictor_pallas.4} parent=11 // pred_check
          %p192 = pneg %p115
        $region22: #{flow_predictor_pallas.4} parent=11 // pred_check_branch
          %194 = sbr.rel (%p192) target = $region24
        $region23: #{flow_predictor_pallas.4} parent=11 // pred_region
          _
        $region24: #{flow_predictor_pallas.4} parent=11 // pred_fallthru
          _
      $region12: #{flow_predictor_pallas.4} parent=5 // pred_fallthru
        _
      %p195 = scmp.lt.s32.totalorder %s12, 4
      // Predicated region
      $region25: #{flow_predictor_pallas.4} parent=5 // pred_check
        %p196 = pneg %p195
      $region26: #{flow_predictor_pallas.4} parent=5 // pred_check_branch
        %198 = sbr.rel (%p196) target = $region28
      $region27: #{flow_predictor_pallas.4} parent=5 // pred_region
        // Predicated region
        $region29: #{flow_predictor_pallas.4} parent=27 // pred_check
          %p199 = pneg %p46
        $region30: #{flow_predictor_pallas.4} parent=27 // pred_check_branch
          %201 = sbr.rel (%p199) target = $region32
        $region31: #{flow_predictor_pallas.4} parent=27 // pred_region
          %s202 = sand.u32 %s36, 1
          %s203 = sand.u32 %s36, 1
          %s204 = smul.addr %s203, 16
          %s205 = scalar_lea.vmem [#allocation2], %s204
          %s206 = smul.addr %s19, 8
          %s207 = sadd.s32 %s20, %s206
          %s208 = smul.addr %s207, 4
          %s209 = scalar_lea.vmem %s0, %s208
          // Predicated region
          $region33: #{flow_predictor_pallas.4} parent=31 // pred_check
            _
          $region34: #{flow_predictor_pallas.4} parent=31 // pred_check_branch
            %211 = sbr.rel (0) target = $region36
          $region35: #{flow_predictor_pallas.4} parent=31 // pred_region
            // Predicated region
            $region37: #{flow_predictor_pallas.4} parent=35 // pred_check
              _
            $region38: #{flow_predictor_pallas.4} parent=35 // pred_check_branch
              %213 = sbr.rel target = $region40
            $region39: #{flow_predictor_pallas.4} parent=35 // pred_region
              // Predicated region
              $region52: #{flow_predictor_pallas.4} parent=39 // pred_check
                _
              $region53: #{flow_predictor_pallas.4} parent=39 // pred_check_branch
                %235 = sbr.rel (0) target = $region55
              $region54: #{flow_predictor_pallas.4} parent=39 // pred_region
                loop: start=0, step=1, limit=1
                $region56: #{flow_predictor_pallas.4} parent=54 // loop_pre_header
                  _
                $region57: #{flow_predictor_pallas.4} parent=54 // loop_header
                  %s237 = sphi 0, %s241
                  %p238 = scmp.ge.s32.totalorder %s237, 1
                  %s242 = sphi %s209, %s209
                  %s243 = sphi %s205, %s205
                $region58: #{flow_predictor_pallas.4} parent=54 // loop_header_branch
                  %240 = sbr.rel (%p238) target = $region62
                $region59: #{flow_predictor_pallas.4} parent=54 // loop_body
                  _
                $region60: #{flow_predictor_pallas.4} parent=54 // loop_footer
                  %s241 = sadd.s32 1, %s237
                $region61: #{flow_predictor_pallas.4} parent=54 // loop_footer_branch
                  %236 = sbr.rel target = $region57
                $region62: #{flow_predictor_pallas.4} parent=54 // loop_exit
                  _
                %s245 = ssub.s32 16, 1
                loop: start=0, step=1, limit=1
                $region63: #{flow_predictor_pallas.4} parent=54 // loop_pre_header
                  _
                $region64: #{flow_predictor_pallas.4} parent=54 // loop_header
                  %s247 = sphi 0, %s251
                  %p248 = scmp.ge.s32.totalorder %s247, 1
                  %s252 = sphi %s209, %s209
                  %s253 = sphi %s205, %s205
                $region65: #{flow_predictor_pallas.4} parent=54 // loop_header_branch
                  %250 = sbr.rel (%p248) target = $region69
                $region66: #{flow_predictor_pallas.4} parent=54 // loop_body
                  %v254 = vld [vmem:[%s252] sm:%s245]
                  %255 = vst [vmem:[%s253] sm:%s245] %v254
                  %v256 = vld [vmem:[%s252 + $0x8] sm:%s245]
                  %257 = vst [vmem:[%s253 + $0x4] sm:%s245] %v256
                  %v258 = vld [vmem:[%s252 + $0x10] sm:%s245]
                  %259 = vst [vmem:[%s253 + $0x8] sm:%s245] %v258
                  %v260 = vld [vmem:[%s252 + $0x18] sm:%s245]
                  %261 = vst [vmem:[%s253 + $0xc] sm:%s245] %v260
                $region67: #{flow_predictor_pallas.4} parent=54 // loop_footer
                  %s251 = sadd.s32 1, %s247
                $region68: #{flow_predictor_pallas.4} parent=54 // loop_footer_branch
                  %246 = sbr.rel target = $region64
                $region69: #{flow_predictor_pallas.4} parent=54 // loop_exit
                  _
              $region55: #{flow_predictor_pallas.4} parent=39 // pred_fallthru
                _
            $region40: #{flow_predictor_pallas.4} parent=35 // pred_fallthru
              _
            // Predicated region
            $region41: #{flow_predictor_pallas.4} parent=35 // pred_check
              _
            $region42: #{flow_predictor_pallas.4} parent=35 // pred_check_branch
              %215 = sbr.rel (0) target = $region44
            $region43: #{flow_predictor_pallas.4} parent=35 // pred_region
              %s217 = ssub.s32 16, 1
              loop: start=0, step=1, limit=1
              $region45: #{flow_predictor_pallas.4} parent=43 // loop_pre_header
                _
              $region46: #{flow_predictor_pallas.4} parent=43 // loop_header
                %s219 = sphi 0, %s223
                %p220 = scmp.ge.s32.totalorder %s219, 1
                %s224 = sphi %s209, %s209
                %s225 = sphi %s205, %s205
              $region47: #{flow_predictor_pallas.4} parent=43 // loop_header_branch
                %222 = sbr.rel (%p220) target = $region51
              $region48: #{flow_predictor_pallas.4} parent=43 // loop_body
                %v226 = vld [vmem:[%s224] sm:%s217]
                %227 = vst [vmem:[%s225] sm:%s217] %v226
                %v228 = vld [vmem:[%s224 + $0x8] sm:%s217]
                %229 = vst [vmem:[%s225 + $0x4] sm:%s217] %v228
                %v230 = vld [vmem:[%s224 + $0x10] sm:%s217]
                %231 = vst [vmem:[%s225 + $0x8] sm:%s217] %v230
                %v232 = vld [vmem:[%s224 + $0x18] sm:%s217]
                %233 = vst [vmem:[%s225 + $0xc] sm:%s217] %v232
              $region49: #{flow_predictor_pallas.4} parent=43 // loop_footer
                %s223 = sadd.s32 1, %s219
              $region50: #{flow_predictor_pallas.4} parent=43 // loop_footer_branch
                %218 = sbr.rel target = $region46
              $region51: #{flow_predictor_pallas.4} parent=43 // loop_exit
                _
            $region44: #{flow_predictor_pallas.4} parent=35 // pred_fallthru
              _
          $region36: #{flow_predictor_pallas.4} parent=31 // pred_fallthru
            _
          %262 = vnop
        $region32: #{flow_predictor_pallas.4} parent=27 // pred_fallthru
          _
      $region28: #{flow_predictor_pallas.4} parent=5 // pred_fallthru
        _
      %p263 = scmp.le.s32.totalorder 1, %s12
      %p264 = scmp.lt.s32.totalorder %s12, 5
      %p265 = pnand %p263, %p264
      %p266 = pneg %p265
      // Predicated region
      $region70: #{flow_predictor_pallas.4} parent=5 // pred_check
        _
      $region71: #{flow_predictor_pallas.4} parent=5 // pred_check_branch
        %268 = sbr.rel (%p265) target = $region73
      $region72: #{flow_predictor_pallas.4} parent=5 // pred_region
        %s269 = ssub.s32 %s12, 1
        %s270 = sand.u32 %s39, 1
        %s271 = sand.u32 %s39, 1
        %s272 = smul.addr %s271, 16
        %s273 = scalar_lea.vmem [#allocation2], %s272
        // Predicated region
        $region74: #{flow_predictor_pallas.4} parent=72 // pred_check
          %p274 = pneg %p52
        $region75: #{flow_predictor_pallas.4} parent=72 // pred_check_branch
          %276 = sbr.rel (%p274) target = $region77
        $region76: #{flow_predictor_pallas.4} parent=72 // pred_region
          _
        $region77: #{flow_predictor_pallas.4} parent=72 // pred_fallthru
          _
        %s277 = sand.u32 %s39, 1
        %s278 = sand.u32 %s39, 1
        %s279 = smul.addr %s278, 16
        %s280 = scalar_lea.vmem [#allocation2], %s279
        %p281 = pneg %p52
        %p282 = pneg %p49
        %p283 = pneg %p73
        %p284 = pneg %p70
        %p285 = pneg %p94
        %p286 = pneg %p91
        %p287 = pneg %p115
        %p288 = pneg %p112
        %p289 = pneg %p143
        %p290 = pneg %p140
        %s291 = sand.u32 %s130, 1
        %s292 = sand.u32 %s130, 1
        %s293 = smul.addr %s292, 16
        %s294 = scalar_lea.vmem [#allocation3], %s293
        %p295 = pneg %p171
        %p296 = pneg %p168
        %p297 = scmp.lt.s32.totalorder %s21, 1
        %s298 = scalar_select %p297, %s21, 1
        %p299 = scmp.lt.s32.totalorder %s22, 1
        %s300 = scalar_select %p299, %s22, 1
        %s301 = smul.addr %s300, 4
        %s302 = smul.addr %s298, 8
        %s303 = sadd.s32 %s301, %s302
        %s304 = smul.addr %s303, 8
        %s305 = scalar_lea.vmem %s5, %s304
        %p306 = scmp.lt.s32.totalorder %s21, 1
        %s307 = scalar_select %p306, %s21, 1
        %p308 = scmp.lt.s32.totalorder %s22, 1
        %s309 = scalar_select %p308, %s22, 1
        %s310 = smul.addr %s309, 4
        %s311 = smul.addr %s307, 8
        %s312 = sadd.s32 %s310, %s311
        %s313 = smul.addr %s312, 8
        %s314 = scalar_lea.vmem %s5, %s313
        %v316 = vld [vmem:[%s273] sm:$0xf]
        %v317 = vld [vmem:[%s273 + $0x4] sm:$0xf]
        %v318 = vld [vmem:[%s273 + $0x8] sm:$0xf]
        %v319 = vld [vmem:[%s273 + $0xc] sm:$0xf]
        %v320 = vunpack.c.l.bf16 %v316
        %v321 = vunpack.c.l.bf16 %v317
        %v322 = vunpack.c.l.bf16 %v318
        %v323 = vunpack.c.l.bf16 %v319
        %v324 = vld [vmem:[%s2] sm:$0xff]
        %v325 = vld [vmem:[%s2 + $0x8] sm:$0xff]
        %v326 = vld [vmem:[%s2 + $0x10] sm:$0xff]
        %v327 = vld [vmem:[%s2 + $0x18] sm:$0xff]
        %329 = vset.pattern.permute.xlu0 0
        %330 = vperm.xlu0 %329, %v324
        %v331 = vpop.permute.xlu0 %330
        %334 = vset.pattern.permute.xlu0 0
        %335 = vperm.xlu0 %334, %v325
        %v336 = vpop.permute.xlu0 %335
        %339 = vset.pattern.permute.xlu0 0
        %340 = vperm.xlu0 %339, %v326
        %v341 = vpop.permute.xlu0 %340
        %344 = vset.pattern.permute.xlu0 0
        %345 = vperm.xlu0 %344, %v327
        %v346 = vpop.permute.xlu0 %345
        %v348 = vmul.f32 %v320, %v331
        %v349 = vmul.f32 %v321, %v336
        %v350 = vmul.f32 %v322, %v341
        %v351 = vmul.f32 %v323, %v346
        %v352 = vld [vmem:[%s3] sm:$0xff]
        %v353 = vld [vmem:[%s3 + $0x8] sm:$0xff]
        %v354 = vld [vmem:[%s3 + $0x10] sm:$0xff]
        %v355 = vld [vmem:[%s3 + $0x18] sm:$0xff]
        %357 = vset.pattern.permute.xlu0 0
        %358 = vperm.xlu0 %357, %v352
        %v359 = vpop.permute.xlu0 %358
        %362 = vset.pattern.permute.xlu0 0
        %363 = vperm.xlu0 %362, %v353
        %v364 = vpop.permute.xlu0 %363
        %367 = vset.pattern.permute.xlu0 0
        %368 = vperm.xlu0 %367, %v354
        %v369 = vpop.permute.xlu0 %368
        %372 = vset.pattern.permute.xlu0 0
        %373 = vperm.xlu0 %372, %v355
        %v374 = vpop.permute.xlu0 %373
        %v376 = vadd.f32 %v348, %v359
        %v377 = vadd.f32 %v349, %v364
        %v378 = vadd.f32 %v350, %v369
        %v379 = vadd.f32 %v351, %v374
        %v380 = vmax.f32 %v376, 0.0
        %v381 = vmax.f32 %v377, 0.0
        %v382 = vmax.f32 %v378, 0.0
        %v383 = vmax.f32 %v379, 0.0
        %v384 = vpack.c.bf16 %v381, %v380
        %v385 = vpack.c.bf16 %v383, %v382
        %v386 = vld [vmem:[%s1] sm:$0xf]
        %v387 = vld [vmem:[%s1 + $0x4] sm:$0xf]
        %v388 = vld [vmem:[%s1 + $0x8] sm:$0xf]
        %v389 = vld [vmem:[%s1 + $0xc] sm:$0xf]
        %v394 = vunpack.c.l.b16 %v386
        %v395 = vunpack.c.l.b16 %v387
        %v396 = vunpack.c.l.b16 %v388
        %v397 = vunpack.c.l.b16 %v389
        %v398 = vpack.c.b16 %v395, %v394
        %v399 = vpack.c.b16 %v397, %v396
        %vm400 = vcmask 261120
        %v402 = vsel %vm400, %v398, 0
        %v405 = vsel %vm400, %v399, 0
        %407 = vmatprep.subr.bf16.mxu0 0
        %408 = vmatpush1.bf16.msra.mxu0 0
        %409 = vmatprep.subr.bf16.mxu0 0
        %410 = vmatpush1.bf16.msra.mxu0 0
        %411 = vmatprep.subr.bf16.mxu0 0
        %412 = vmatpush1.bf16.msra.mxu0 0
        %413 = vmatprep.subr.bf16.mxu0 0
        %414 = vmatpush1.bf16.msra.mxu0 0
        %415 = vmatprep.subr.bf16.mxu0 0
        %416 = vmatpush1.bf16.msra.mxu0 0
        %417 = vmatprep.subr.bf16.mxu0 0
        %418 = vmatpush1.bf16.msra.mxu0 0
        %419 = vmatprep.subr.bf16.mxu0 0
        %420 = vmatpush1.bf16.msra.mxu0 %v385
        %421 = vmatprep.subr.bf16.mxu0 0
        %422 = vmatpush1.bf16.msra.mxu0 %v384
        %423 = vmatprep.subr.bf16.mxu0 0
        %424 = vmatpush2.bf16.msra.mxu0 0
        %425 = vmatprep.subr.bf16.mxu0 0
        %426 = vmatpush2.bf16.msra.mxu0 0
        %427 = vmatprep.subr.bf16.mxu0 0
        %428 = vmatpush2.bf16.msra.mxu0 0
        %429 = vmatprep.subr.bf16.mxu0 0
        %430 = vmatpush2.bf16.msra.mxu0 0
        %431 = vmatprep.subr.bf16.mxu0 0
        %432 = vmatpush2.bf16.msra.mxu0 0
        %433 = vmatprep.subr.bf16.mxu0 0
        %434 = vmatpush2.bf16.msra.mxu0 0
        %435 = vmatprep.subr.bf16.mxu0 0
        %436 = vmatpush2.bf16.msra.mxu0 0
        %437 = vmatprep.subr.bf16.mxu0 0
        %438 = vmatpush2.bf16.msra.mxu0 0
        %439 = vmatprep.mubr.bf16.mxu0 0
        %440 = vmatmul.mubr.bf16.gmra.mxu0 %v402
        %v441 = vpop.f32.mrf.mxu0
        %v442 = vadd.f32 0.0, %v441
        %v443 = vpop.f32.mrf.mxu0
        %v444 = vpop.f32.mrf.mxu0
        %v445 = vadd.f32 0.0, %v444
        %v446 = vpop.f32.mrf.mxu0
        %447 = vmatprep.mubr.bf16.mxu0 0
        %448 = vmatmul.mubr.bf16.gmra.mxu0 %v405
        %v449 = vpop.f32.mrf.mxu0
        %v450 = vadd.f32 0.0, %v449
        %v451 = vpop.f32.mrf.mxu0
        %v452 = vpop.f32.mrf.mxu0
        %v453 = vadd.f32 0.0, %v452
        %v454 = vpop.f32.mrf.mxu0
        %455 = vdwg.mxu0
        %v456 = vpack.c.bf16 %v445, %v442
        %v457 = vpack.c.bf16 %v453, %v450
        %v460 = vunpack.c.l.b16 %v456
        %v461 = vunpack.c.h.b16 %v456
        %v462 = vunpack.c.l.b16 %v457
        %v463 = vunpack.c.h.b16 %v457
        %v464 = vpack.c.b16 %v460, %v460
        %v465 = vpack.c.b16 %v461, %v461
        %v466 = vpack.c.b16 %v462, %v462
        %v467 = vpack.c.b16 %v463, %v463
        %472 = vst [vmem:[%s294] sm:$0xf] %v464
        %473 = vst [vmem:[%s294 + $0x4] sm:$0xf] %v465
        %474 = vst [vmem:[%s294 + $0x8] sm:$0xf] %v466
        %475 = vst [vmem:[%s294 + $0xc] sm:$0xf] %v467
        %v476 = vlaneseq
        %v477 = vand.u32 %v476, 127
        %s478 = smul.u32 %s22, 128
        %v479 = vstv %s478
        %v480 = vadd.s32 %v479, %v477
        %vm481 = vcmp.lt.s32.totalorder %v480, 200
        %v482 = vsel %vm481, 1, 0
        %v483 = vcvt.s32.f32 %v482
        %v484 = vmul.f32 %v442, %v483
        %v485 = vmul.f32 %v445, %v483
        %v486 = vmul.f32 %v450, %v483
        %v487 = vmul.f32 %v453, %v483
        %488 = vadd.xlane.f32.xlu0 %v484
        %v489 = vpop.xlane.xlu0 %488
        %490 = vadd.xlane.f32.xlu0 %v485
        %v491 = vpop.xlane.xlu0 %490
        %492 = vadd.xlane.f32.xlu0 %v486
        %v493 = vpop.xlane.xlu0 %492
        %494 = vadd.xlane.f32.xlu0 %v487
        %v495 = vpop.xlane.xlu0 %494
        %vm496 = vcmask 7168
        %497 = vst.msk [vmem:[%s314] sm:$0xff] %vm496, %v489
        %498 = vst.msk [vmem:[%s314 + $0x8] sm:$0xff] %vm496, %v491
        %499 = vst.msk [vmem:[%s314 + $0x10] sm:$0xff] %vm496, %v493
        %500 = vst.msk [vmem:[%s314 + $0x18] sm:$0xff] %vm496, %v495
        %v501 = vmul.f32 %v484, %v442
        %v502 = vmul.f32 %v485, %v445
        %v503 = vmul.f32 %v486, %v450
        %v504 = vmul.f32 %v487, %v453
        %505 = vadd.xlane.f32.xlu0 %v501
        %v506 = vpop.xlane.xlu0 %505
        %507 = vadd.xlane.f32.xlu0 %v502
        %v508 = vpop.xlane.xlu0 %507
        %509 = vadd.xlane.f32.xlu0 %v503
        %v510 = vpop.xlane.xlu0 %509
        %511 = vadd.xlane.f32.xlu0 %v504
        %v512 = vpop.xlane.xlu0 %511
        %vm513 = vcmask 15368
        %514 = vst.msk [vmem:[%s314] sm:$0xff] %vm513, %v506
        %515 = vst.msk [vmem:[%s314 + $0x8] sm:$0xff] %vm513, %v508
        %516 = vst.msk [vmem:[%s314 + $0x10] sm:$0xff] %vm513, %v510
        %517 = vst.msk [vmem:[%s314 + $0x18] sm:$0xff] %vm513, %v512
        %s518 = sand.u32 %s130, 1
        %s519 = sand.u32 %s130, 1
        %s520 = smul.addr %s519, 16
        %s521 = scalar_lea.vmem [#allocation3], %s520
        %p522 = scmp.lt.s32.totalorder %s21, 1
        %s523 = scalar_select %p522, %s21, 1
        %p524 = scmp.lt.s32.totalorder %s22, 1
        %s525 = scalar_select %p524, %s22, 1
        %s526 = smul.addr %s525, 4
        %s527 = smul.addr %s523, 8
        %s528 = sadd.s32 %s526, %s527
        %s529 = smul.addr %s528, 8
        %s530 = scalar_lea.vmem %s5, %s529
        // Predicated region
        $region78: #{flow_predictor_pallas.4} parent=72 // pred_check
          %p531 = pneg %p140
        $region79: #{flow_predictor_pallas.4} parent=72 // pred_check_branch
          %533 = sbr.rel (%p531) target = $region81
        $region80: #{flow_predictor_pallas.4} parent=72 // pred_region
          %s534 = smul.addr %s21, 8
          %s535 = sadd.s32 %s22, %s534
          %s536 = smul.addr %s535, 4
          %s537 = scalar_lea.vmem %s4, %s536
          // Predicated region
          $region82: #{flow_predictor_pallas.4} parent=80 // pred_check
            _
          $region83: #{flow_predictor_pallas.4} parent=80 // pred_check_branch
            %539 = sbr.rel (0) target = $region85
          $region84: #{flow_predictor_pallas.4} parent=80 // pred_region
            // Predicated region
            $region86: #{flow_predictor_pallas.4} parent=84 // pred_check
              _
            $region87: #{flow_predictor_pallas.4} parent=84 // pred_check_branch
              %541 = sbr.rel target = $region89
            $region88: #{flow_predictor_pallas.4} parent=84 // pred_region
              // Predicated region
              $region101: #{flow_predictor_pallas.4} parent=88 // pred_check
                _
              $region102: #{flow_predictor_pallas.4} parent=88 // pred_check_branch
                %563 = sbr.rel (0) target = $region104
              $region103: #{flow_predictor_pallas.4} parent=88 // pred_region
                loop: start=0, step=1, limit=1
                $region105: #{flow_predictor_pallas.4} parent=103 // loop_pre_header
                  _
                $region106: #{flow_predictor_pallas.4} parent=103 // loop_header
                  %s565 = sphi 0, %s569
                  %p566 = scmp.ge.s32.totalorder %s565, 1
                  %s570 = sphi %s521, %s521
                  %s571 = sphi %s537, %s537
                $region107: #{flow_predictor_pallas.4} parent=103 // loop_header_branch
                  %568 = sbr.rel (%p566) target = $region111
                $region108: #{flow_predictor_pallas.4} parent=103 // loop_body
                  _
                $region109: #{flow_predictor_pallas.4} parent=103 // loop_footer
                  %s569 = sadd.s32 1, %s565
                $region110: #{flow_predictor_pallas.4} parent=103 // loop_footer_branch
                  %564 = sbr.rel target = $region106
                $region111: #{flow_predictor_pallas.4} parent=103 // loop_exit
                  _
                %s573 = ssub.s32 16, 1
                loop: start=0, step=1, limit=1
                $region112: #{flow_predictor_pallas.4} parent=103 // loop_pre_header
                  _
                $region113: #{flow_predictor_pallas.4} parent=103 // loop_header
                  %s575 = sphi 0, %s579
                  %p576 = scmp.ge.s32.totalorder %s575, 1
                  %s580 = sphi %s521, %s521
                  %s581 = sphi %s537, %s537
                $region114: #{flow_predictor_pallas.4} parent=103 // loop_header_branch
                  %578 = sbr.rel (%p576) target = $region118
                $region115: #{flow_predictor_pallas.4} parent=103 // loop_body
                  %v582 = vld [vmem:[%s580] sm:%s573]
                  %583 = vst [vmem:[%s581] sm:%s573] %v582
                  %v584 = vld [vmem:[%s580 + $0x4] sm:%s573]
                  %585 = vst [vmem:[%s581 + $0x8] sm:%s573] %v584
                  %v586 = vld [vmem:[%s580 + $0x8] sm:%s573]
                  %587 = vst [vmem:[%s581 + $0x10] sm:%s573] %v586
                  %v588 = vld [vmem:[%s580 + $0xc] sm:%s573]
                  %589 = vst [vmem:[%s581 + $0x18] sm:%s573] %v588
                $region116: #{flow_predictor_pallas.4} parent=103 // loop_footer
                  %s579 = sadd.s32 1, %s575
                $region117: #{flow_predictor_pallas.4} parent=103 // loop_footer_branch
                  %574 = sbr.rel target = $region113
                $region118: #{flow_predictor_pallas.4} parent=103 // loop_exit
                  _
              $region104: #{flow_predictor_pallas.4} parent=88 // pred_fallthru
                _
            $region89: #{flow_predictor_pallas.4} parent=84 // pred_fallthru
              _
            // Predicated region
            $region90: #{flow_predictor_pallas.4} parent=84 // pred_check
              _
            $region91: #{flow_predictor_pallas.4} parent=84 // pred_check_branch
              %543 = sbr.rel (0) target = $region93
            $region92: #{flow_predictor_pallas.4} parent=84 // pred_region
              %s545 = ssub.s32 16, 1
              loop: start=0, step=1, limit=1
              $region94: #{flow_predictor_pallas.4} parent=92 // loop_pre_header
                _
              $region95: #{flow_predictor_pallas.4} parent=92 // loop_header
                %s547 = sphi 0, %s551
                %p548 = scmp.ge.s32.totalorder %s547, 1
                %s552 = sphi %s521, %s521
                %s553 = sphi %s537, %s537
              $region96: #{flow_predictor_pallas.4} parent=92 // loop_header_branch
                %550 = sbr.rel (%p548) target = $region100
              $region97: #{flow_predictor_pallas.4} parent=92 // loop_body
                %v554 = vld [vmem:[%s552] sm:%s545]
                %555 = vst [vmem:[%s553] sm:%s545] %v554
                %v556 = vld [vmem:[%s552 + $0x4] sm:%s545]
                %557 = vst [vmem:[%s553 + $0x8] sm:%s545] %v556
                %v558 = vld [vmem:[%s552 + $0x8] sm:%s545]
                %559 = vst [vmem:[%s553 + $0x10] sm:%s545] %v558
                %v560 = vld [vmem:[%s552 + $0xc] sm:%s545]
                %561 = vst [vmem:[%s553 + $0x18] sm:%s545] %v560
              $region98: #{flow_predictor_pallas.4} parent=92 // loop_footer
                %s551 = sadd.s32 1, %s547
              $region99: #{flow_predictor_pallas.4} parent=92 // loop_footer_branch
                %546 = sbr.rel target = $region95
              $region100: #{flow_predictor_pallas.4} parent=92 // loop_exit
                _
            $region93: #{flow_predictor_pallas.4} parent=84 // pred_fallthru
              _
          $region85: #{flow_predictor_pallas.4} parent=80 // pred_fallthru
            _
          %590 = vnop
        $region81: #{flow_predictor_pallas.4} parent=72 // pred_fallthru
          _
        // Predicated region
        $region119: #{flow_predictor_pallas.4} parent=72 // pred_check
          %p591 = pneg %p168
        $region120: #{flow_predictor_pallas.4} parent=72 // pred_check_branch
          %593 = sbr.rel (%p591) target = $region122
        $region121: #{flow_predictor_pallas.4} parent=72 // pred_region
          _
        $region122: #{flow_predictor_pallas.4} parent=72 // pred_fallthru
          _
      $region73: #{flow_predictor_pallas.4} parent=5 // pred_fallthru
        _
      %p594 = scmp.le.s32.totalorder 2, %s12
      // Predicated region
      $region123: #{flow_predictor_pallas.4} parent=5 // pred_check
        %p595 = pneg %p594
      $region124: #{flow_predictor_pallas.4} parent=5 // pred_check_branch
        %597 = sbr.rel (%p595) target = $region126
      $region125: #{flow_predictor_pallas.4} parent=5 // pred_region
        %s598 = ssub.s32 %s12, 2
        // Predicated region
        $region127: #{flow_predictor_pallas.4} parent=125 // pred_check
          %p599 = pneg %p146
        $region128: #{flow_predictor_pallas.4} parent=125 // pred_check_branch
          %601 = sbr.rel (%p599) target = $region130
        $region129: #{flow_predictor_pallas.4} parent=125 // pred_region
          %s602 = sand.u32 %s131, 1
          %s603 = sand.u32 %s131, 1
          %s604 = smul.addr %s603, 16
          %s605 = scalar_lea.vmem [#allocation3], %s604
        $region130: #{flow_predictor_pallas.4} parent=125 // pred_fallthru
          _
        // Predicated region
        $region131: #{flow_predictor_pallas.4} parent=125 // pred_check
          %p606 = pneg %p174
        $region132: #{flow_predictor_pallas.4} parent=125 // pred_check_branch
          %608 = sbr.rel (%p606) target = $region134
        $region133: #{flow_predictor_pallas.4} parent=125 // pred_region
          %p609 = scmp.lt.s32.totalorder %s23, 1
          %s610 = scalar_select %p609, %s23, 1
          %p611 = scmp.lt.s32.totalorder %s24, 1
          %s612 = scalar_select %p611, %s24, 1
          %s613 = smul.addr %s612, 4
          %s614 = smul.addr %s610, 8
          %s615 = sadd.s32 %s613, %s614
          %s616 = smul.addr %s615, 8
          %s617 = scalar_lea.vmem %s5, %s616
        $region134: #{flow_predictor_pallas.4} parent=125 // pred_fallthru
          _
      $region126: #{flow_predictor_pallas.4} parent=5 // pred_fallthru
        _
    $region6: #{flow_predictor_pallas.4} parent=1 // loop_footer
      %s16 = sadd.s32 1, %s12
    $region7: #{flow_predictor_pallas.4} parent=1 // loop_footer_branch
      %11 = sbr.rel target = $region3
    $region8: #{flow_predictor_pallas.4} parent=1 // loop_exit
      _

// kernel: flow_predictor_pallas.5
$region0: #{flow_predictor_pallas.5}
  #allocation0 [shape = 'u32[]', space=smem, size = 0x4, offset = 0x4, fixed_abs, tag = 'smem constant byte address 0x4 - core index']
  #allocation1 [shape = 'u32[144,128]{1,0:T(1,128)}', space=vmem, size = 0x12000, scoped, tag = 'internal scratch']
  %s0 = inlined_call_operand.vmem [shape: bf16[2,32,256], index: 0, kind: input, shape index: {}]
  %s1 = inlined_call_operand.vmem [shape: bf16[3,32], index: 1, kind: input, shape index: {}]
  %s2 = inlined_call_operand.vmem [shape: f32[32,1], index: 2, kind: input, shape index: {}]
  %s3 = inlined_call_operand.vmem [shape: f32[32,1], index: 3, kind: input, shape index: {}]
  %s4 = inlined_call_operand.vmem [shape: f32[2,3,256], index: 4, kind: output, shape index: {}]
  %s5 = sld [smem:[#allocation0]]
  $region90: #{flow_predictor_pallas.5} parent=0
    _
  %s7 = ssub.s32 1, %s5
  %s8 = scalar_select 0, %s7, %s5
  $region1: #{flow_predictor_pallas.5} parent=0
    #allocation2 [shape = 'u8[16384]{0}', space=vmem, size = 0x4000, scoped, tag = 'input window, operand 0']
    loop: start=0, step=1, limit=6
    $region2: #{flow_predictor_pallas.5} parent=1 // loop_pre_header
      _
    $region3: #{flow_predictor_pallas.5} parent=1 // loop_header
      %s10 = sphi 0, %s14
      %p11 = scmp.ge.s32.totalorder %s10, 6
      %s17 = sphi 0, %s29
      %s18 = sphi 0, %s25
      %s19 = sphi 0, %s17
      %s20 = sphi 0, %s18
      %s21 = sphi 0, %s19
      %s22 = sphi 0, %s20
      %s34 = sphi 0, %s36
      %s37 = sphi 0, %s34
      %s38 = sphi 0, %s37
      %s54 = sphi 0, %s38
      %s58 = sphi 0, %s58
      %s60 = sphi 0, %s58
      %s61 = sphi 0, %s60
      %s75 = sphi 0, %s61
      %s79 = sphi 0, %s79
      %s81 = sphi 0, %s79
      %s82 = sphi 0, %s81
      %s96 = sphi 0, %s82
      %s100 = sphi 0, %s100
      %s102 = sphi 0, %s100
      %s103 = sphi 0, %s102
      %s117 = sphi 0, %s103
      %s125 = sphi 0, %s127
      %s128 = sphi 0, %s125
      %s129 = sphi 0, %s128
      %s145 = sphi 0, %s129
    $region4: #{flow_predictor_pallas.5} parent=1 // loop_header_branch
      %13 = sbr.rel (%p11) target = $region8
    $region5: #{flow_predictor_pallas.5} parent=1 // loop_body
      %s15 = ssub.s32 %s10, 1
      %s16 = ssub.s32 %s10, 2
      %s23 = sadd.s32 1, %s18
      %p24 = scmp.ge.s32.totalorder %s23, 2
      %s25 = scalar_select %p24, 0, %s23
      %s26 = sadd.s32 1, %s17
      %s27 = scalar_select %p24, %s26, %s17
      %p28 = scmp.ge.s32.totalorder %s27, 2
      %s29 = scalar_select %p28, 0, %s27
      %s30 = ssub.s32 %s17, %s29
      %s31 = ssub.s32 %s18, %s25
      %s32 = sor.u32 %s30, %s31
      %p33 = scmp.eq.s32.totalorder %s32, 0
      %s35 = sadd.s32 %s34, 1
      %s36 = scalar_select %p33, %s34, %s35
      %p39 = pneg %p33
      %p40 = scmp.eq.s32.totalorder %s10, 3
      %p41 = por %p39, %p40
      %p42 = scmp.ne.s32.totalorder %s34, %s37
      %p43 = scmp.eq.s32.totalorder %s10, 0
      %p44 = por %p42, %p43
      %p45 = scmp.ne.s32.totalorder %s34, %s37
      %p46 = scmp.eq.s32.totalorder %s15, 3
      %p47 = por %p45, %p46
      %p48 = scmp.ne.s32.totalorder %s37, %s38
      %p49 = scmp.eq.s32.totalorder %s15, 0
      %p50 = por %p48, %p49
      %p51 = scmp.ne.s32.totalorder %s37, %s38
      %p52 = scmp.eq.s32.totalorder %s16, 3
      %p53 = por %p51, %p52
      %p55 = scmp.ne.s32.totalorder %s38, %s54
      %p56 = scmp.eq.s32.totalorder %s16, 0
      %p57 = por %p55, %p56
      %s59 = sadd.s32 %s58, 1
      %p62 = scmp.eq.s32.totalorder %s10, 3
      %p63 = scmp.ne.s32.totalorder %s58, %s60
      %p64 = scmp.eq.s32.totalorder %s10, 0
      %p65 = por %p63, %p64
      %p66 = scmp.ne.s32.totalorder %s58, %s60
      %p67 = scmp.eq.s32.totalorder %s15, 3
      %p68 = por %p66, %p67
      %p69 = scmp.ne.s32.totalorder %s60, %s61
      %p70 = scmp.eq.s32.totalorder %s15, 0
      %p71 = por %p69, %p70
      %p72 = scmp.ne.s32.totalorder %s60, %s61
      %p73 = scmp.eq.s32.totalorder %s16, 3
      %p74 = por %p72, %p73
      %p76 = scmp.ne.s32.totalorder %s61, %s75
      %p77 = scmp.eq.s32.totalorder %s16, 0
      %p78 = por %p76, %p77
      %s80 = sadd.s32 %s79, 1
      %p83 = scmp.eq.s32.totalorder %s10, 3
      %p84 = scmp.ne.s32.totalorder %s79, %s81
      %p85 = scmp.eq.s32.totalorder %s10, 0
      %p86 = por %p84, %p85
      %p87 = scmp.ne.s32.totalorder %s79, %s81
      %p88 = scmp.eq.s32.totalorder %s15, 3
      %p89 = por %p87, %p88
      %p90 = scmp.ne.s32.totalorder %s81, %s82
      %p91 = scmp.eq.s32.totalorder %s15, 0
      %p92 = por %p90, %p91
      %p93 = scmp.ne.s32.totalorder %s81, %s82
      %p94 = scmp.eq.s32.totalorder %s16, 3
      %p95 = por %p93, %p94
      %p97 = scmp.ne.s32.totalorder %s82, %s96
      %p98 = scmp.eq.s32.totalorder %s16, 0
      %p99 = por %p97, %p98
      %s101 = sadd.s32 %s100, 1
      %p104 = scmp.eq.s32.totalorder %s10, 3
      %p105 = scmp.ne.s32.totalorder %s100, %s102
      %p106 = scmp.eq.s32.totalorder %s10, 0
      %p107 = por %p105, %p106
      %p108 = scmp.ne.s32.totalorder %s100, %s102
      %p109 = scmp.eq.s32.totalorder %s15, 3
      %p110 = por %p108, %p109
      %p111 = scmp.ne.s32.totalorder %s102, %s103
      %p112 = scmp.eq.s32.totalorder %s15, 0
      %p113 = por %p111, %p112
      %p114 = scmp.ne.s32.totalorder %s102, %s103
      %p115 = scmp.eq.s32.totalorder %s16, 3
      %p116 = por %p114, %p115
      %p118 = scmp.ne.s32.totalorder %s103, %s117
      %p119 = scmp.eq.s32.totalorder %s16, 0
      %p120 = por %p118, %p119
      %s121 = ssub.s32 %s17, %s29
      %s122 = ssub.s32 %s18, %s25
      %s123 = sor.u32 %s121, %s122
      %p124 = scmp.eq.s32.totalorder %s123, 0
      %s126 = sadd.s32 %s125, 1
      %s127 = scalar_select %p124, %s125, %s126
      %p130 = pneg %p124
      %p131 = scmp.eq.s32.totalorder %s10, 3
      %p132 = por %p130, %p131
      %p133 = scmp.ne.s32.totalorder %s125, %s128
      %p134 = scmp.eq.s32.totalorder %s10, 0
      %p135 = por %p133, %p134
      %p136 = scmp.ne.s32.totalorder %s125, %s128
      %p137 = scmp.eq.s32.totalorder %s15, 3
      %p138 = por %p136, %p137
      %p139 = scmp.ne.s32.totalorder %s128, %s129
      %p140 = scmp.eq.s32.totalorder %s15, 0
      %p141 = por %p139, %p140
      %p142 = scmp.ne.s32.totalorder %s128, %s129
      %p143 = scmp.eq.s32.totalorder %s16, 3
      %p144 = por %p142, %p143
      %p146 = scmp.ne.s32.totalorder %s129, %s145
      %p147 = scmp.eq.s32.totalorder %s16, 0
      %p148 = por %p146, %p147
      %p149 = scmp.le.s32.totalorder 1, %s10
      %p150 = scmp.lt.s32.totalorder %s10, 5
      %p151 = pnand %p149, %p150
      %p152 = pneg %p151
      // Predicated region
      $region9: #{flow_predictor_pallas.5} parent=5 // pred_check
        _
      $region10: #{flow_predictor_pallas.5} parent=5 // pred_check_branch
        %154 = sbr.rel (%p151) target = $region12
      $region11: #{flow_predictor_pallas.5} parent=5 // pred_region
        %s155 = ssub.s32 %s10, 1
        // Predicated region
        $region13: #{flow_predictor_pallas.5} parent=11 // pred_check
          %p156 = pneg %p71
        $region14: #{flow_predictor_pallas.5} parent=11 // pred_check_branch
          %158 = sbr.rel (%p156) target = $region16
        $region15: #{flow_predictor_pallas.5} parent=11 // pred_region
          _
        $region16: #{flow_predictor_pallas.5} parent=11 // pred_fallthru
          _
        // Predicated region
        $region17: #{flow_predictor_pallas.5} parent=11 // pred_check
          %p159 = pneg %p92
        $region18: #{flow_predictor_pallas.5} parent=11 // pred_check_branch
          %161 = sbr.rel (%p159) target = $region20
        $region19: #{flow_predictor_pallas.5} parent=11 // pred_region
          _
        $region20: #{flow_predictor_pallas.5} parent=11 // pred_fallthru
          _
        // Predicated region
        $region21: #{flow_predictor_pallas.5} parent=11 // pred_check
          %p162 = pneg %p113
        $region22: #{flow_predictor_pallas.5} parent=11 // pred_check_branch
          %164 = sbr.rel (%p162) target = $region24
        $region23: #{flow_predictor_pallas.5} parent=11 // pred_region
          _
        $region24: #{flow_predictor_pallas.5} parent=11 // pred_fallthru
          _
      $region12: #{flow_predictor_pallas.5} parent=5 // pred_fallthru
        _
      %p165 = scmp.lt.s32.totalorder %s10, 4
      // Predicated region
      $region25: #{flow_predictor_pallas.5} parent=5 // pred_check
        %p166 = pneg %p165
      $region26: #{flow_predictor_pallas.5} parent=5 // pred_check_branch
        %168 = sbr.rel (%p166) target = $region28
      $region27: #{flow_predictor_pallas.5} parent=5 // pred_region
        // Predicated region
        $region29: #{flow_predictor_pallas.5} parent=27 // pred_check
          %p169 = pneg %p44
        $region30: #{flow_predictor_pallas.5} parent=27 // pred_check_branch
          %171 = sbr.rel (%p169) target = $region32
        $region31: #{flow_predictor_pallas.5} parent=27 // pred_region
          %s172 = sand.u32 %s34, 1
          %s173 = sand.u32 %s34, 1
          %s174 = smul.addr %s173, 16
          %s175 = scalar_lea.vmem [#allocation2], %s174
          %s176 = smul.addr %s17, 8
          %s177 = sadd.s32 %s18, %s176
          %s178 = smul.addr %s177, 4
          %s179 = scalar_lea.vmem %s0, %s178
          // Predicated region
          $region33: #{flow_predictor_pallas.5} parent=31 // pred_check
            _
          $region34: #{flow_predictor_pallas.5} parent=31 // pred_check_branch
            %181 = sbr.rel (0) target = $region36
          $region35: #{flow_predictor_pallas.5} parent=31 // pred_region
            // Predicated region
            $region37: #{flow_predictor_pallas.5} parent=35 // pred_check
              _
            $region38: #{flow_predictor_pallas.5} parent=35 // pred_check_branch
              %183 = sbr.rel target = $region40
            $region39: #{flow_predictor_pallas.5} parent=35 // pred_region
              // Predicated region
              $region52: #{flow_predictor_pallas.5} parent=39 // pred_check
                _
              $region53: #{flow_predictor_pallas.5} parent=39 // pred_check_branch
                %205 = sbr.rel (0) target = $region55
              $region54: #{flow_predictor_pallas.5} parent=39 // pred_region
                loop: start=0, step=1, limit=1
                $region56: #{flow_predictor_pallas.5} parent=54 // loop_pre_header
                  _
                $region57: #{flow_predictor_pallas.5} parent=54 // loop_header
                  %s207 = sphi 0, %s211
                  %p208 = scmp.ge.s32.totalorder %s207, 1
                  %s212 = sphi %s179, %s179
                  %s213 = sphi %s175, %s175
                $region58: #{flow_predictor_pallas.5} parent=54 // loop_header_branch
                  %210 = sbr.rel (%p208) target = $region62
                $region59: #{flow_predictor_pallas.5} parent=54 // loop_body
                  _
                $region60: #{flow_predictor_pallas.5} parent=54 // loop_footer
                  %s211 = sadd.s32 1, %s207
                $region61: #{flow_predictor_pallas.5} parent=54 // loop_footer_branch
                  %206 = sbr.rel target = $region57
                $region62: #{flow_predictor_pallas.5} parent=54 // loop_exit
                  _
                %s215 = ssub.s32 16, 1
                loop: start=0, step=1, limit=1
                $region63: #{flow_predictor_pallas.5} parent=54 // loop_pre_header
                  _
                $region64: #{flow_predictor_pallas.5} parent=54 // loop_header
                  %s217 = sphi 0, %s221
                  %p218 = scmp.ge.s32.totalorder %s217, 1
                  %s222 = sphi %s179, %s179
                  %s223 = sphi %s175, %s175
                $region65: #{flow_predictor_pallas.5} parent=54 // loop_header_branch
                  %220 = sbr.rel (%p218) target = $region69
                $region66: #{flow_predictor_pallas.5} parent=54 // loop_body
                  %v224 = vld [vmem:[%s222] sm:%s215]
                  %225 = vst [vmem:[%s223] sm:%s215] %v224
                  %v226 = vld [vmem:[%s222 + $0x8] sm:%s215]
                  %227 = vst [vmem:[%s223 + $0x4] sm:%s215] %v226
                  %v228 = vld [vmem:[%s222 + $0x10] sm:%s215]
                  %229 = vst [vmem:[%s223 + $0x8] sm:%s215] %v228
                  %v230 = vld [vmem:[%s222 + $0x18] sm:%s215]
                  %231 = vst [vmem:[%s223 + $0xc] sm:%s215] %v230
                $region67: #{flow_predictor_pallas.5} parent=54 // loop_footer
                  %s221 = sadd.s32 1, %s217
                $region68: #{flow_predictor_pallas.5} parent=54 // loop_footer_branch
                  %216 = sbr.rel target = $region64
                $region69: #{flow_predictor_pallas.5} parent=54 // loop_exit
                  _
              $region55: #{flow_predictor_pallas.5} parent=39 // pred_fallthru
                _
            $region40: #{flow_predictor_pallas.5} parent=35 // pred_fallthru
              _
            // Predicated region
            $region41: #{flow_predictor_pallas.5} parent=35 // pred_check
              _
            $region42: #{flow_predictor_pallas.5} parent=35 // pred_check_branch
              %185 = sbr.rel (0) target = $region44
            $region43: #{flow_predictor_pallas.5} parent=35 // pred_region
              %s187 = ssub.s32 16, 1
              loop: start=0, step=1, limit=1
              $region45: #{flow_predictor_pallas.5} parent=43 // loop_pre_header
                _
              $region46: #{flow_predictor_pallas.5} parent=43 // loop_header
                %s189 = sphi 0, %s193
                %p190 = scmp.ge.s32.totalorder %s189, 1
                %s194 = sphi %s179, %s179
                %s195 = sphi %s175, %s175
              $region47: #{flow_predictor_pallas.5} parent=43 // loop_header_branch
                %192 = sbr.rel (%p190) target = $region51
              $region48: #{flow_predictor_pallas.5} parent=43 // loop_body
                %v196 = vld [vmem:[%s194] sm:%s187]
                %197 = vst [vmem:[%s195] sm:%s187] %v196
                %v198 = vld [vmem:[%s194 + $0x8] sm:%s187]
                %199 = vst [vmem:[%s195 + $0x4] sm:%s187] %v198
                %v200 = vld [vmem:[%s194 + $0x10] sm:%s187]
                %201 = vst [vmem:[%s195 + $0x8] sm:%s187] %v200
                %v202 = vld [vmem:[%s194 + $0x18] sm:%s187]
                %203 = vst [vmem:[%s195 + $0xc] sm:%s187] %v202
              $region49: #{flow_predictor_pallas.5} parent=43 // loop_footer
                %s193 = sadd.s32 1, %s189
              $region50: #{flow_predictor_pallas.5} parent=43 // loop_footer_branch
                %188 = sbr.rel target = $region46
              $region51: #{flow_predictor_pallas.5} parent=43 // loop_exit
                _
            $region44: #{flow_predictor_pallas.5} parent=35 // pred_fallthru
              _
          $region36: #{flow_predictor_pallas.5} parent=31 // pred_fallthru
            _
          %232 = vnop
        $region32: #{flow_predictor_pallas.5} parent=27 // pred_fallthru
          _
      $region28: #{flow_predictor_pallas.5} parent=5 // pred_fallthru
        _
      %p233 = scmp.le.s32.totalorder 1, %s10
      %p234 = scmp.lt.s32.totalorder %s10, 5
      %p235 = pnand %p233, %p234
      %p236 = pneg %p235
      // Predicated region
      $region70: #{flow_predictor_pallas.5} parent=5 // pred_check
        _
      $region71: #{flow_predictor_pallas.5} parent=5 // pred_check_branch
        %238 = sbr.rel (%p235) target = $region73
      $region72: #{flow_predictor_pallas.5} parent=5 // pred_region
        %s239 = ssub.s32 %s10, 1
        %s240 = sand.u32 %s37, 1
        %s241 = sand.u32 %s37, 1
        %s242 = smul.addr %s241, 16
        %s243 = scalar_lea.vmem [#allocation2], %s242
        // Predicated region
        $region74: #{flow_predictor_pallas.5} parent=72 // pred_check
          %p244 = pneg %p50
        $region75: #{flow_predictor_pallas.5} parent=72 // pred_check_branch
          %246 = sbr.rel (%p244) target = $region77
        $region76: #{flow_predictor_pallas.5} parent=72 // pred_region
          _
        $region77: #{flow_predictor_pallas.5} parent=72 // pred_fallthru
          _
        %s247 = sand.u32 %s37, 1
        %s248 = sand.u32 %s37, 1
        %s249 = smul.addr %s248, 16
        %s250 = scalar_lea.vmem [#allocation2], %s249
        %p251 = pneg %p50
        %p252 = pneg %p47
        %p253 = pneg %p71
        %p254 = pneg %p68
        %p255 = pneg %p92
        %p256 = pneg %p89
        %p257 = pneg %p113
        %p258 = pneg %p110
        %p259 = pneg %p141
        %p260 = pneg %p138
        %p261 = scmp.lt.s32.totalorder %s19, 1
        %s262 = scalar_select %p261, %s19, 1
        %p263 = scmp.lt.s32.totalorder %s20, 1
        %s264 = scalar_select %p263, %s20, 1
        %s265 = smul.addr %s262, 2
        %s266 = sadd.s32 %s264, %s265
        %s267 = smul.addr %s266, 4
        %s268 = scalar_lea.vmem %s4, %s267
        %p269 = scmp.lt.s32.totalorder %s19, 1
        %s270 = scalar_select %p269, %s19, 1
        %p271 = scmp.lt.s32.totalorder %s20, 1
        %s272 = scalar_select %p271, %s20, 1
        %s273 = smul.addr %s270, 2
        %s274 = sadd.s32 %s272, %s273
        %s275 = smul.addr %s274, 4
        %s276 = scalar_lea.vmem %s4, %s275
        %v278 = vld [vmem:[%s243] sm:$0xf]
        %v279 = vld [vmem:[%s243 + $0x4] sm:$0xf]
        %v280 = vld [vmem:[%s243 + $0x8] sm:$0xf]
        %v281 = vld [vmem:[%s243 + $0xc] sm:$0xf]
        %v282 = vunpack.c.l.bf16 %v278
        %v283 = vunpack.c.l.bf16 %v279
        %v284 = vunpack.c.l.bf16 %v280
        %v285 = vunpack.c.l.bf16 %v281
        %v286 = vld [vmem:[%s2] sm:$0xff]
        %v287 = vld [vmem:[%s2 + $0x8] sm:$0xff]
        %v288 = vld [vmem:[%s2 + $0x10] sm:$0xff]
        %v289 = vld [vmem:[%s2 + $0x18] sm:$0xff]
        %291 = vset.pattern.permute.xlu0 0
        %292 = vperm.xlu0 %291, %v286
        %v293 = vpop.permute.xlu0 %292
        %296 = vset.pattern.permute.xlu0 0
        %297 = vperm.xlu0 %296, %v287
        %v298 = vpop.permute.xlu0 %297
        %301 = vset.pattern.permute.xlu0 0
        %302 = vperm.xlu0 %301, %v288
        %v303 = vpop.permute.xlu0 %302
        %306 = vset.pattern.permute.xlu0 0
        %307 = vperm.xlu0 %306, %v289
        %v308 = vpop.permute.xlu0 %307
        %v310 = vmul.f32 %v282, %v293
        %v311 = vmul.f32 %v283, %v298
        %v312 = vmul.f32 %v284, %v303
        %v313 = vmul.f32 %v285, %v308
        %v314 = vld [vmem:[%s3] sm:$0xff]
        %v315 = vld [vmem:[%s3 + $0x8] sm:$0xff]
        %v316 = vld [vmem:[%s3 + $0x10] sm:$0xff]
        %v317 = vld [vmem:[%s3 + $0x18] sm:$0xff]
        %319 = vset.pattern.permute.xlu0 0
        %320 = vperm.xlu0 %319, %v314
        %v321 = vpop.permute.xlu0 %320
        %324 = vset.pattern.permute.xlu0 0
        %325 = vperm.xlu0 %324, %v315
        %v326 = vpop.permute.xlu0 %325
        %329 = vset.pattern.permute.xlu0 0
        %330 = vperm.xlu0 %329, %v316
        %v331 = vpop.permute.xlu0 %330
        %334 = vset.pattern.permute.xlu0 0
        %335 = vperm.xlu0 %334, %v317
        %v336 = vpop.permute.xlu0 %335
        %v338 = vadd.f32 %v310, %v321
        %v339 = vadd.f32 %v311, %v326
        %v340 = vadd.f32 %v312, %v331
        %v341 = vadd.f32 %v313, %v336
        %v342 = vmax.f32 %v338, 0.0
        %v343 = vmax.f32 %v339, 0.0
        %v344 = vmax.f32 %v340, 0.0
        %v345 = vmax.f32 %v341, 0.0
        %v346 = vld [vmem:[%s1] sm:$0x3]
        %v347 = vpack.c.bf16 %v343, %v342
        %v348 = vpack.c.bf16 %v345, %v344
        %vm349 = vcmask 261120
        %v351 = vsel %vm349, %v346, 0
        %353 = vmatprep.subr.bf16.mxu0 0
        %354 = vmatpush1.bf16.msra.mxu0 0
        %355 = vmatprep.subr.bf16.mxu0 0
        %356 = vmatpush1.bf16.msra.mxu0 0
        %357 = vmatprep.subr.bf16.mxu0 0
        %358 = vmatpush1.bf16.msra.mxu0 0
        %359 = vmatprep.subr.bf16.mxu0 0
        %360 = vmatpush1.bf16.msra.mxu0 0
        %361 = vmatprep.subr.bf16.mxu0 0
        %362 = vmatpush1.bf16.msra.mxu0 0
        %363 = vmatprep.subr.bf16.mxu0 0
        %364 = vmatpush1.bf16.msra.mxu0 0
        %365 = vmatprep.subr.bf16.mxu0 0
        %366 = vmatpush1.bf16.msra.mxu0 %v348
        %367 = vmatprep.subr.bf16.mxu0 0
        %368 = vmatpush1.bf16.msra.mxu0 %v347
        %369 = vmatprep.subr.bf16.mxu0 0
        %370 = vmatpush2.bf16.msra.mxu0 0
        %371 = vmatprep.subr.bf16.mxu0 0
        %372 = vmatpush2.bf16.msra.mxu0 0
        %373 = vmatprep.subr.bf16.mxu0 0
        %374 = vmatpush2.bf16.msra.mxu0 0
        %375 = vmatprep.subr.bf16.mxu0 0
        %376 = vmatpush2.bf16.msra.mxu0 0
        %377 = vmatprep.subr.bf16.mxu0 0
        %378 = vmatpush2.bf16.msra.mxu0 0
        %379 = vmatprep.subr.bf16.mxu0 0
        %380 = vmatpush2.bf16.msra.mxu0 0
        %381 = vmatprep.subr.bf16.mxu0 0
        %382 = vmatpush2.bf16.msra.mxu0 0
        %383 = vmatprep.subr.bf16.mxu0 0
        %384 = vmatpush2.bf16.msra.mxu0 0
        %385 = vmatprep.mubr.bf16.mxu0 0
        %386 = vmatmul.mubr.bf16.gmra.mxu0 %v351
        %v387 = vpop.f32.mrf.mxu0
        %v388 = vadd.f32 0.0, %v387
        %v389 = vpop.f32.mrf.mxu0
        %v390 = vpop.f32.mrf.mxu0
        %v391 = vpop.f32.mrf.mxu0
        %392 = vdwg.mxu0
        %393 = vst [vmem:[%s276] sm:$0x7] %v388
        %p394 = scmp.lt.s32.totalorder %s19, 1
        %s395 = scalar_select %p394, %s19, 1
        %p396 = scmp.lt.s32.totalorder %s20, 1
        %s397 = scalar_select %p396, %s20, 1
        %s398 = smul.addr %s395, 2
        %s399 = sadd.s32 %s397, %s398
        %s400 = smul.addr %s399, 4
        %s401 = scalar_lea.vmem %s4, %s400
        // Predicated region
        $region78: #{flow_predictor_pallas.5} parent=72 // pred_check
          %p402 = pneg %p138
        $region79: #{flow_predictor_pallas.5} parent=72 // pred_check_branch
          %404 = sbr.rel (%p402) target = $region81
        $region80: #{flow_predictor_pallas.5} parent=72 // pred_region
          _
        $region81: #{flow_predictor_pallas.5} parent=72 // pred_fallthru
          _
      $region73: #{flow_predictor_pallas.5} parent=5 // pred_fallthru
        _
      %p405 = scmp.le.s32.totalorder 2, %s10
      // Predicated region
      $region82: #{flow_predictor_pallas.5} parent=5 // pred_check
        %p406 = pneg %p405
      $region83: #{flow_predictor_pallas.5} parent=5 // pred_check_branch
        %408 = sbr.rel (%p406) target = $region85
      $region84: #{flow_predictor_pallas.5} parent=5 // pred_region
        %s409 = ssub.s32 %s10, 2
        // Predicated region
        $region86: #{flow_predictor_pallas.5} parent=84 // pred_check
          %p410 = pneg %p144
        $region87: #{flow_predictor_pallas.5} parent=84 // pred_check_branch
          %412 = sbr.rel (%p410) target = $region89
        $region88: #{flow_predictor_pallas.5} parent=84 // pred_region
          %p413 = scmp.lt.s32.totalorder %s21, 1
          %s414 = scalar_select %p413, %s21, 1
          %p415 = scmp.lt.s32.totalorder %s22, 1
          %s416 = scalar_select %p415, %s22, 1
          %s417 = smul.addr %s414, 2
          %s418 = sadd.s32 %s416, %s417
          %s419 = smul.addr %s418, 4
          %s420 = scalar_lea.vmem %s4, %s419
        $region89: #{flow_predictor_pallas.5} parent=84 // pred_fallthru
          _
      $region85: #{flow_predictor_pallas.5} parent=5 // pred_fallthru
        _
    $region6: #{flow_predictor_pallas.5} parent=1 // loop_footer
      %s14 = sadd.s32 1, %s10
    $region7: #{flow_predictor_pallas.5} parent=1 // loop_footer_branch
      %9 = sbr.rel target = $region3
    $region8: #{flow_predictor_pallas.5} parent=1 // loop_exit
      _

</llo_original>
